<compile_context>
chip_gen: v7x
topology: tpu7x:2x2x1
jax: 0.10.0
libtpu: 0.0.40
codegen_flags: <defaults>
</compile_context>

<pallas_src>
import functools
import math

import jax
import jax.numpy as jnp
from jax import lax
from jax.experimental import pallas as pl
from jax.experimental.pallas import tpu as pltpu


_NEG_BIG = -1e30  # finite "masked score" value (avoids inf - inf -> NaN)


# --------------------------------------------------------------------------- #
# Sizing helpers                                                               #
# --------------------------------------------------------------------------- #
def _round_up(n, m):
    return ((n + m - 1) // m) * m


def _vmem_capacity_bytes():
    """Physical VMEM per TensorCore (64 MiB on v7x, 128 MiB on v5e/v6e)."""
    try:
        cap = getattr(pltpu.get_tpu_info(), "vmem_capacity_bytes", None)
        if cap:
            return int(cap)
    except Exception:
        pass
    return 128 * 1024 * 1024


def _divisor_tiles(n, candidates=(512, 256, 128)):
    """Tile sizes (multiples of 128) that evenly divide n, largest first."""
    tiles = [c for c in candidates if c <= n and n % c == 0]
    return tiles if tiles else [n]


def _k1_vmem_bytes(ts, dm_p, nqkv, nb_heads, dhp):
    x_blk = 2 * ts * dm_p * 2                   # bf16 x tile, double-buffered
    w_blk = 2 * dm_p * nqkv * 2                 # resident bf16 fused weight (2 bufs)
    out_blk = 3 * 2 * nb_heads * ts * dhp * 2   # bf16 q/k/v output blocks
    tmp = ts * nqkv * 4                         # f32 matmul result before cast
    return x_blk + w_blk + out_blk + tmp


def _k2_vmem_bytes(tq, tk, nb_heads, dhp, dm_p):
    q_blk = 2 * nb_heads * tq * dhp * 2
    kv_blk = 2 * 2 * nb_heads * tk * dhp * 2
    wp_blk = 2 * nb_heads * dhp * dm_p * 2
    out_blk = 2 * tq * dm_p * 4
    scratch = (2 * nb_heads * tq + nb_heads * tq * dhp) * 4
    tmps = 3 * nb_heads * tq * tk * 4           # s, p and slack (f32)
    return q_blk + kv_blk + wp_blk + out_blk + scratch + tmps


# --------------------------------------------------------------------------- #
# Kernel 1: fused QKV projection (resident weight) -> head-major bf16 q/k/v    #
# --------------------------------------------------------------------------- #
def _qkv_proj_kernel(x_ref, w_ref, q_ref, k_ref, v_ref, *, nb_heads, dhp):
    # x_ref: (1, TS, Dm_p) bf16 row tile of one batch element.
    # w_ref: (Dm_p, 3*H*Dhp) bf16, resident (constant index_map, fetched once).
    # Outputs: (1, H, TS, Dhp) bf16, head-major so kernel 2 never re-lays-out.
    qkv = jnp.dot(x_ref[0], w_ref[...], preferred_element_type=jnp.float32)
    qkv = qkv.astype(q_ref.dtype)               # (TS, 3*H*Dhp) bf16
    for h in range(nb_heads):                   # static; 128-aligned lane slices
        q_ref[0, h] = qkv[:, h * dhp:(h + 1) * dhp]
        k_ref[0, h] = qkv[:, (nb_heads + h) * dhp:(nb_heads + h + 1) * dhp]
        v_ref[0, h] = qkv[:, (2 * nb_heads + h) * dhp:(2 * nb_heads + h + 1) * dhp]


# --------------------------------------------------------------------------- #
# Kernel 2: flash-style attention over kv tiles + fused output projection      #
# --------------------------------------------------------------------------- #
def _attn_out_kernel(q_ref, k_ref, v_ref, wp_ref, o_ref, m_sc, l_sc, acc_sc,
                     *, nb_heads, seq_len, tk, need_mask):
    # q_ref: (1, H, TQ, Dhp) bf16 (softmax scale already folded into W_q)
    # k_ref/v_ref: (1, H, TK, Dhp) bf16;  wp_ref: (H*Dhp, Dm_p) bf16 resident
    # o_ref: (1, TQ, Dm_p);  m_sc/l_sc: (H, TQ, 1) f32;  acc_sc: (H, TQ, Dhp) f32
    ki = pl.program_id(2)

    @pl.when(ki == 0)
    def _init():
        m_sc[...] = jnp.full(m_sc.shape, _NEG_BIG, m_sc.dtype)
        l_sc[...] = jnp.zeros(l_sc.shape, l_sc.dtype)
        acc_sc[...] = jnp.zeros(acc_sc.shape, acc_sc.dtype)

    q = q_ref[0]                                            # (H, TQ, Dhp)
    k = k_ref[0]                                            # (H, TK, Dhp)
    v = v_ref[0]                                            # (H, TK, Dhp)

    # Heads on the leading (batch) axis; contraction over the last dim of both
    # operands -> no explicit k transpose through the XLU.
    s = jnp.einsum('hqd,hkd->hqk', q, k,
                   preferred_element_type=jnp.float32)      # (H, TQ, TK) f32

    if need_mask:
        # Mask padded key positions (S was padded up to a multiple of 128).
        key_idx = ki * tk + lax.broadcasted_iota(jnp.int32, (1, 1, tk), 2)
        s = jnp.where(key_idx < seq_len, s, _NEG_BIG)

    m_prev = m_sc[...]
    m_new = jnp.maximum(m_prev, jnp.max(s, axis=-1, keepdims=True))
    alpha = jnp.exp(m_prev - m_new)                         # (H, TQ, 1)
    p = jnp.exp(s - m_new)                                  # (H, TQ, TK) f32
    l_sc[...] = alpha * l_sc[...] + jnp.sum(p, axis=-1, keepdims=True)
    acc_sc[...] = alpha * acc_sc[...] + jnp.einsum(
        'hqk,hkd->hqd', p.astype(v.dtype), v,
        preferred_element_type=jnp.float32)                 # (H, TQ, Dhp) f32
    m_sc[...] = m_new

    @pl.when(ki == pl.num_programs(2) - 1)
    def _finalize():
        # Normalize with the EUP approximate reciprocal, lay the heads out on
        # the lane axis (whole-vreg slabs, Dhp is a multiple of 128), and do a
        # SINGLE (TQ, H*Dhp) x (H*Dhp, Dm_p) projection matmul.
        inv_l = pl.reciprocal(l_sc[...], approx=True)       # (H, TQ, 1)
        parts = [(acc_sc[h] * inv_l[h]).astype(wp_ref.dtype)
                 for h in range(nb_heads)]                  # H x (TQ, Dhp) bf16
        y = jnp.concatenate(parts, axis=-1)                 # (TQ, H*Dhp)
        o_ref[0] = jnp.dot(y, wp_ref[...],
                           preferred_element_type=jnp.float32).astype(o_ref.dtype)


# --------------------------------------------------------------------------- #
# Wrapper                                                                      #
# --------------------------------------------------------------------------- #
def self_attention(x, w_attn, w_proj, *, dim_heads, attn_scale):
    """x: (B, S, dim_model) f32; w_attn: (dim_model, 3*attn_dim); w_proj: (attn_dim, dim_model)."""
    B, S, dim_model = x.shape
    attn_dim = w_attn.shape[1] // 3
    assert attn_dim % dim_heads == 0
    nb_heads = attn_dim // dim_heads
    dh = dim_heads
    scale = attn_scale / dim_heads

    # ---- one-time layout prep (wrapper-side, amortized) -----------------------
    dm_p = _round_up(dim_model, 128)     # lane-dense feature dim
    dhp = _round_up(dh, 128)             # lane-dense / full-depth head dim
    sp = _round_up(S, 128)               # tileable sequence length
    pad_dm, pad_s = dm_p - dim_model, sp - S
    nqkv = 3 * nb_heads * dhp

    # bf16 activations: halves the x DMA bytes (only ever an MXU operand).
    x_p = jnp.pad(x, ((0, 0), (0, pad_s), (0, pad_dm))) if (pad_s or pad_dm) else x
    x_p = x_p.astype(jnp.bfloat16)

    # Fused QKV weight, columns ordered [q_h0..q_hH | k_h0.. | v_h0..], each head
    # zero-padded Dh->Dhp; softmax scale folded into the q columns (free).
    w4 = w_attn.reshape(dim_model, 3, nb_heads, dh)         # PyTorch col order (n, head, dh)
    w4 = jnp.stack([w4[:, 0] * scale, w4[:, 1], w4[:, 2]], axis=1)
    w4 = jnp.pad(w4, ((0, pad_dm), (0, 0), (0, 0), (0, dhp - dh)))
    w_qkv = w4.reshape(dm_p, nqkv).astype(jnp.bfloat16)

    # Output-projection weight as (H*Dhp, Dm_p); padded Dh rows are zero.
    wp = w_proj.reshape(nb_heads, dh, dim_model)
    wp = jnp.pad(wp, ((0, 0), (0, dhp - dh), (0, pad_dm)))
    wp = wp.reshape(nb_heads * dhp, dm_p).astype(jnp.bfloat16)

    # ---- per-generation VMEM budgeting ----------------------------------------
    # v7x: 64 MiB/TC -> limit ~48 MiB; v5e/v6e: 128 MiB -> limit ~96 MiB.
    vmem_cap = _vmem_capacity_bytes()
    vmem_limit = (vmem_cap * 3) // 4     # headroom for compiler-internal scratch
    budget = (vmem_cap * 3) // 5         # target when choosing our own tiles

    tiles = _divisor_tiles(sp)
    ts = next((t for t in tiles
               if _k1_vmem_bytes(t, dm_p, nqkv, nb_heads, dhp) <= budget), tiles[-1])
    tq, tk = next(((a, b) for a in tiles for b in tiles
                   if _k2_vmem_bytes(a, b, nb_heads, dhp, dm_p) <= budget),
                  (tiles[-1], tiles[-1]))
    # v7x megacore note: B*(sp//tq) and B*(sp//ts) "parallel" tiles are even
    # whenever B is even, so both TensorCores stay busy.

    # ---- kernel 1: fused QKV projection -> head-major bf16 q/k/v ---------------
    q, k, v = pl.pallas_call(
        functools.partial(_qkv_proj_kernel, nb_heads=nb_heads, dhp=dhp),
        out_shape=(
            jax.ShapeDtypeStruct((B, nb_heads, sp, dhp), jnp.bfloat16),
            jax.ShapeDtypeStruct((B, nb_heads, sp, dhp), jnp.bfloat16),
            jax.ShapeDtypeStruct((B, nb_heads, sp, dhp), jnp.bfloat16),
        ),
        grid_spec=pltpu.PrefetchScalarGridSpec(
            num_scalar_prefetch=0,
            grid=(B, sp // ts),
            in_specs=[
                pl.BlockSpec((1, ts, dm_p), lambda b, si: (b, si, 0)),
                pl.BlockSpec((dm_p, nqkv), lambda b, si: (0, 0)),   # resident weight
            ],
            out_specs=[
                pl.BlockSpec((1, nb_heads, ts, dhp), lambda b, si: (b, 0, si, 0)),
                pl.BlockSpec((1, nb_heads, ts, dhp), lambda b, si: (b, 0, si, 0)),
                pl.BlockSpec((1, nb_heads, ts, dhp), lambda b, si: (b, 0, si, 0)),
            ],
        ),
        compiler_params=pltpu.CompilerParams(
            dimension_semantics=("parallel", "parallel"),
            vmem_limit_bytes=vmem_limit),
    )(x_p, w_qkv)

    # ---- kernel 2: flash attention over kv tiles + fused output projection -----
    out_p = pl.pallas_call(
        functools.partial(_attn_out_kernel, nb_heads=nb_heads, seq_len=S,
                          tk=tk, need_mask=(sp != S)),
        out_shape=jax.ShapeDtypeStruct((B, sp, dm_p), x.dtype),
        grid_spec=pltpu.PrefetchScalarGridSpec(
            num_scalar_prefetch=0,
            grid=(B, sp // tq, sp // tk),
            in_specs=[
                pl.BlockSpec((1, nb_heads, tq, dhp), lambda b, qi, ki: (b, 0, qi, 0)),
                pl.BlockSpec((1, nb_heads, tk, dhp), lambda b, qi, ki: (b, 0, ki, 0)),
                pl.BlockSpec((1, nb_heads, tk, dhp), lambda b, qi, ki: (b, 0, ki, 0)),
                pl.BlockSpec((nb_heads * dhp, dm_p), lambda b, qi, ki: (0, 0)),  # resident
            ],
            out_specs=pl.BlockSpec((1, tq, dm_p), lambda b, qi, ki: (b, qi, 0)),
            scratch_shapes=[
                pltpu.VMEM((nb_heads, tq, 1), jnp.float32),    # running max
                pltpu.VMEM((nb_heads, tq, 1), jnp.float32),    # running denom
                pltpu.VMEM((nb_heads, tq, dhp), jnp.float32),  # un-normalized acc
            ],
        ),
        compiler_params=pltpu.CompilerParams(
            dimension_semantics=("parallel", "parallel", "arbitrary"),
            vmem_limit_bytes=vmem_limit),
    )(q, k, v, wp)

    if pad_s or pad_dm:
        return out_p[:, :S, :dim_model]
    return out_p


# --------------------------------------------------------------------------- #
# Pure-JAX reference matching the PyTorch forward exactly                      #
# --------------------------------------------------------------------------- #
def self_attention_ref(x, w_attn, w_proj, *, dim_heads, attn_scale):
    B, S, dim_model = x.shape
    attn_dim = w_attn.shape[1] // 3
    nb_heads = attn_dim // dim_heads
    qkv = jnp.einsum('bsd,de->bse', x, w_attn)                      # (B, S, 3*A)
    qkv = qkv.reshape(B, S, 3, nb_heads, dim_heads)
    q = jnp.transpose(qkv[:, :, 0], (0, 2, 1, 3))                   # (B, H, S, Dh)
    k = jnp.transpose(qkv[:, :, 1], (0, 2, 1, 3))
    v = jnp.transpose(qkv[:, :, 2], (0, 2, 1, 3))
    scale = attn_scale / dim_heads
    s = jnp.einsum('bhqd,bhkd->bhqk', q, k) * scale
    p = jax.nn.softmax(s, axis=-1)
    y = jnp.einsum('bhqk,bhkd->bhqd', p, v)                         # (B, H, S, Dh)
    y = jnp.transpose(y, (0, 2, 1, 3)).reshape(B, S, attn_dim)
    return jnp.einsum('bsa,ad->bsd', y, w_proj)


if __name__ == "__main__":
    # Small shapes consistent with the module.
    B, S = 2, 8
    dim_model = 32
    attn_dim = 32
    dim_heads = 8
    attn_scale = 2.0

    key = jax.random.PRNGKey(0)
    kx, ka, kp = jax.random.split(key, 3)

    x = jax.random.normal(kx, (B, S, dim_model), dtype=jnp.float32)

    # PyTorch Linear default init U(-1/sqrt(fan_in), +1/sqrt(fan_in)); weights
    # stored as (in_features, out_features) so the kernels do x @ W.
    bound_attn = 1.0 / math.sqrt(dim_model)
    bound_proj = 1.0 / math.sqrt(attn_dim)
    w_attn = jax.random.uniform(ka, (dim_model, 3 * attn_dim),
                                minval=-bound_attn, maxval=bound_attn,
                                dtype=jnp.float32)
    w_proj = jax.random.uniform(kp, (attn_dim, dim_model),
                                minval=-bound_proj, maxval=bound_proj,
                                dtype=jnp.float32)

    out = self_attention(x, w_attn, w_proj,
                         dim_heads=dim_heads, attn_scale=attn_scale)
    out = jax.block_until_ready(out)

    ref = self_attention_ref(x, w_attn, w_proj,
                             dim_heads=dim_heads, attn_scale=attn_scale)
    ref = jax.block_until_ready(ref)

    assert out.shape == (B, S, dim_model)
    # bf16 MXU operands with f32 accumulation -> slightly looser tolerance.
    assert jnp.allclose(out, ref, atol=3e-2, rtol=3e-2), "Pallas output mismatch vs reference"

    print("KERNEL_OK")
</pallas_src>

<mosaic_0001>
module attributes {stable_mosaic.version = 11 : i64} {
  func.func @_qkv_proj_kernel(%arg0: i32, %arg1: i32, %arg2: memref<1x128x128xbf16, #tpu.memory_space<vmem>>, %arg3: memref<128x1536xbf16, #tpu.memory_space<vmem>>, %arg4: memref<1x4x128x128xbf16, #tpu.memory_space<vmem>>, %arg5: memref<1x4x128x128xbf16, #tpu.memory_space<vmem>>, %arg6: memref<1x4x128x128xbf16, #tpu.memory_space<vmem>>) attributes {dimension_semantics = [#tpu.dimension_semantics<parallel>, #tpu.dimension_semantics<parallel>], iteration_bounds = array<i64: 2, 1>, scalar_prefetch = 0 : i64, scratch_operands = 0 : i64, tpu.core_type = #tpu.core_type<tc>, window_params = [{transform_indices = @transform_0, window_bounds = array<i64: 1, 128, 128>}, {pipeline_mode = #tpu.pipeline_mode<synchronous>, transform_indices = @transform_1, window_bounds = array<i64: 128, 1536>}, {transform_indices = @transform_2, window_bounds = array<i64: 1, 4, 128, 128>}, {transform_indices = @transform_3, window_bounds = array<i64: 1, 4, 128, 128>}, {transform_indices = @transform_4, window_bounds = array<i64: 1, 4, 128, 128>}]} {
    %c0 = arith.constant 0 : index
    %c0_0 = arith.constant 0 : index
    %c0_1 = arith.constant 0 : index
    %0 = vector.load %arg2[%c0, %c0_0, %c0_1] : memref<1x128x128xbf16, #tpu.memory_space<vmem>>, vector<1x128x128xbf16>
    %1 = vector.shape_cast %0 : vector<1x128x128xbf16> to vector<128x128xbf16>
    %c0_2 = arith.constant 0 : index
    %c0_3 = arith.constant 0 : index
    %2 = vector.load %arg3[%c0_2, %c0_3] : memref<128x1536xbf16, #tpu.memory_space<vmem>>, vector<128x1536xbf16>
    %cst = arith.constant dense<0.000000e+00> : vector<128x1536xf32>
    %3 = tpu.matmul %1, %2, %cst {dimension_numbers = #tpu.dot_dimension_numbers<[1], [0], [0], [1], [0, 0, 1, 1], [], []>} : vector<128x128xbf16>, vector<128x1536xbf16>, vector<128x1536xf32> -> vector<128x1536xf32>
    %4 = arith.truncf %3 : vector<128x1536xf32> to vector<128x1536xbf16>
    %5 = vector.extract_strided_slice %4 {offsets = [0, 0], sizes = [128, 128], strides = [1, 1]} : vector<128x1536xbf16> to vector<128x128xbf16>
    %c0_4 = arith.constant 0 : index
    %c0_5 = arith.constant 0 : index
    %c0_6 = arith.constant 0 : index
    %c0_7 = arith.constant 0 : index
    %6 = vector.load %arg4[%c0_4, %c0_5, %c0_6, %c0_7] : memref<1x4x128x128xbf16, #tpu.memory_space<vmem>>, vector<1x1x128x128xbf16>
    %7 = vector.shape_cast %6 : vector<1x1x128x128xbf16> to vector<128x128xbf16>
    %8 = vector.shape_cast %5 : vector<128x128xbf16> to vector<1x1x128x128xbf16>
    tpu.vector_store %arg4[%c0_4, %c0_5, %c0_6, %c0_7], %8 {strides = array<i32>} : memref<1x4x128x128xbf16, #tpu.memory_space<vmem>>, vector<1x1x128x128xbf16>,
    %9 = vector.extract_strided_slice %4 {offsets = [0, 512], sizes = [128, 128], strides = [1, 1]} : vector<128x1536xbf16> to vector<128x128xbf16>
    %c0_8 = arith.constant 0 : index
    %c0_9 = arith.constant 0 : index
    %c0_10 = arith.constant 0 : index
    %c0_11 = arith.constant 0 : index
    %10 = vector.load %arg5[%c0_8, %c0_9, %c0_10, %c0_11] : memref<1x4x128x128xbf16, #tpu.memory_space<vmem>>, vector<1x1x128x128xbf16>
    %11 = vector.shape_cast %10 : vector<1x1x128x128xbf16> to vector<128x128xbf16>
    %12 = vector.shape_cast %9 : vector<128x128xbf16> to vector<1x1x128x128xbf16>
    tpu.vector_store %arg5[%c0_8, %c0_9, %c0_10, %c0_11], %12 {strides = array<i32>} : memref<1x4x128x128xbf16, #tpu.memory_space<vmem>>, vector<1x1x128x128xbf16>,
    %13 = vector.extract_strided_slice %4 {offsets = [0, 1024], sizes = [128, 128], strides = [1, 1]} : vector<128x1536xbf16> to vector<128x128xbf16>
    %c0_12 = arith.constant 0 : index
    %c0_13 = arith.constant 0 : index
    %c0_14 = arith.constant 0 : index
    %c0_15 = arith.constant 0 : index
    %14 = vector.load %arg6[%c0_12, %c0_13, %c0_14, %c0_15] : memref<1x4x128x128xbf16, #tpu.memory_space<vmem>>, vector<1x1x128x128xbf16>
    %15 = vector.shape_cast %14 : vector<1x1x128x128xbf16> to vector<128x128xbf16>
    %16 = vector.shape_cast %13 : vector<128x128xbf16> to vector<1x1x128x128xbf16>
    tpu.vector_store %arg6[%c0_12, %c0_13, %c0_14, %c0_15], %16 {strides = array<i32>} : memref<1x4x128x128xbf16, #tpu.memory_space<vmem>>, vector<1x1x128x128xbf16>,
    %17 = vector.extract_strided_slice %4 {offsets = [0, 128], sizes = [128, 128], strides = [1, 1]} : vector<128x1536xbf16> to vector<128x128xbf16>
    %c0_16 = arith.constant 0 : index
    %c1 = arith.constant 1 : index
    %c0_17 = arith.constant 0 : index
    %c0_18 = arith.constant 0 : index
    %18 = vector.load %arg4[%c0_16, %c1, %c0_17, %c0_18] : memref<1x4x128x128xbf16, #tpu.memory_space<vmem>>, vector<1x1x128x128xbf16>
    %19 = vector.shape_cast %18 : vector<1x1x128x128xbf16> to vector<128x128xbf16>
    %20 = vector.shape_cast %17 : vector<128x128xbf16> to vector<1x1x128x128xbf16>
    tpu.vector_store %arg4[%c0_16, %c1, %c0_17, %c0_18], %20 {strides = array<i32>} : memref<1x4x128x128xbf16, #tpu.memory_space<vmem>>, vector<1x1x128x128xbf16>,
    %21 = vector.extract_strided_slice %4 {offsets = [0, 640], sizes = [128, 128], strides = [1, 1]} : vector<128x1536xbf16> to vector<128x128xbf16>
    %c0_19 = arith.constant 0 : index
    %c1_20 = arith.constant 1 : index
    %c0_21 = arith.constant 0 : index
    %c0_22 = arith.constant 0 : index
    %22 = vector.load %arg5[%c0_19, %c1_20, %c0_21, %c0_22] : memref<1x4x128x128xbf16, #tpu.memory_space<vmem>>, vector<1x1x128x128xbf16>
    %23 = vector.shape_cast %22 : vector<1x1x128x128xbf16> to vector<128x128xbf16>
    %24 = vector.shape_cast %21 : vector<128x128xbf16> to vector<1x1x128x128xbf16>
    tpu.vector_store %arg5[%c0_19, %c1_20, %c0_21, %c0_22], %24 {strides = array<i32>} : memref<1x4x128x128xbf16, #tpu.memory_space<vmem>>, vector<1x1x128x128xbf16>,
    %25 = vector.extract_strided_slice %4 {offsets = [0, 1152], sizes = [128, 128], strides = [1, 1]} : vector<128x1536xbf16> to vector<128x128xbf16>
    %c0_23 = arith.constant 0 : index
    %c1_24 = arith.constant 1 : index
    %c0_25 = arith.constant 0 : index
    %c0_26 = arith.constant 0 : index
    %26 = vector.load %arg6[%c0_23, %c1_24, %c0_25, %c0_26] : memref<1x4x128x128xbf16, #tpu.memory_space<vmem>>, vector<1x1x128x128xbf16>
    %27 = vector.shape_cast %26 : vector<1x1x128x128xbf16> to vector<128x128xbf16>
    %28 = vector.shape_cast %25 : vector<128x128xbf16> to vector<1x1x128x128xbf16>
    tpu.vector_store %arg6[%c0_23, %c1_24, %c0_25, %c0_26], %28 {strides = array<i32>} : memref<1x4x128x128xbf16, #tpu.memory_space<vmem>>, vector<1x1x128x128xbf16>,
    %29 = vector.extract_strided_slice %4 {offsets = [0, 256], sizes = [128, 128], strides = [1, 1]} : vector<128x1536xbf16> to vector<128x128xbf16>
    %c0_27 = arith.constant 0 : index
    %c2 = arith.constant 2 : index
    %c0_28 = arith.constant 0 : index
    %c0_29 = arith.constant 0 : index
    %30 = vector.load %arg4[%c0_27, %c2, %c0_28, %c0_29] : memref<1x4x128x128xbf16, #tpu.memory_space<vmem>>, vector<1x1x128x128xbf16>
    %31 = vector.shape_cast %30 : vector<1x1x128x128xbf16> to vector<128x128xbf16>
    %32 = vector.shape_cast %29 : vector<128x128xbf16> to vector<1x1x128x128xbf16>
    tpu.vector_store %arg4[%c0_27, %c2, %c0_28, %c0_29], %32 {strides = array<i32>} : memref<1x4x128x128xbf16, #tpu.memory_space<vmem>>, vector<1x1x128x128xbf16>,
    %33 = vector.extract_strided_slice %4 {offsets = [0, 768], sizes = [128, 128], strides = [1, 1]} : vector<128x1536xbf16> to vector<128x128xbf16>
    %c0_30 = arith.constant 0 : index
    %c2_31 = arith.constant 2 : index
    %c0_32 = arith.constant 0 : index
    %c0_33 = arith.constant 0 : index
    %34 = vector.load %arg5[%c0_30, %c2_31, %c0_32, %c0_33] : memref<1x4x128x128xbf16, #tpu.memory_space<vmem>>, vector<1x1x128x128xbf16>
    %35 = vector.shape_cast %34 : vector<1x1x128x128xbf16> to vector<128x128xbf16>
    %36 = vector.shape_cast %33 : vector<128x128xbf16> to vector<1x1x128x128xbf16>
    tpu.vector_store %arg5[%c0_30, %c2_31, %c0_32, %c0_33], %36 {strides = array<i32>} : memref<1x4x128x128xbf16, #tpu.memory_space<vmem>>, vector<1x1x128x128xbf16>,
    %37 = vector.extract_strided_slice %4 {offsets = [0, 1280], sizes = [128, 128], strides = [1, 1]} : vector<128x1536xbf16> to vector<128x128xbf16>
    %c0_34 = arith.constant 0 : index
    %c2_35 = arith.constant 2 : index
    %c0_36 = arith.constant 0 : index
    %c0_37 = arith.constant 0 : index
    %38 = vector.load %arg6[%c0_34, %c2_35, %c0_36, %c0_37] : memref<1x4x128x128xbf16, #tpu.memory_space<vmem>>, vector<1x1x128x128xbf16>
    %39 = vector.shape_cast %38 : vector<1x1x128x128xbf16> to vector<128x128xbf16>
    %40 = vector.shape_cast %37 : vector<128x128xbf16> to vector<1x1x128x128xbf16>
    tpu.vector_store %arg6[%c0_34, %c2_35, %c0_36, %c0_37], %40 {strides = array<i32>} : memref<1x4x128x128xbf16, #tpu.memory_space<vmem>>, vector<1x1x128x128xbf16>,
    %41 = vector.extract_strided_slice %4 {offsets = [0, 384], sizes = [128, 128], strides = [1, 1]} : vector<128x1536xbf16> to vector<128x128xbf16>
    %c0_38 = arith.constant 0 : index
    %c3 = arith.constant 3 : index
    %c0_39 = arith.constant 0 : index
    %c0_40 = arith.constant 0 : index
    %42 = vector.load %arg4[%c0_38, %c3, %c0_39, %c0_40] : memref<1x4x128x128xbf16, #tpu.memory_space<vmem>>, vector<1x1x128x128xbf16>
    %43 = vector.shape_cast %42 : vector<1x1x128x128xbf16> to vector<128x128xbf16>
    %44 = vector.shape_cast %41 : vector<128x128xbf16> to vector<1x1x128x128xbf16>
    tpu.vector_store %arg4[%c0_38, %c3, %c0_39, %c0_40], %44 {strides = array<i32>} : memref<1x4x128x128xbf16, #tpu.memory_space<vmem>>, vector<1x1x128x128xbf16>,
    %45 = vector.extract_strided_slice %4 {offsets = [0, 896], sizes = [128, 128], strides = [1, 1]} : vector<128x1536xbf16> to vector<128x128xbf16>
    %c0_41 = arith.constant 0 : index
    %c3_42 = arith.constant 3 : index
    %c0_43 = arith.constant 0 : index
    %c0_44 = arith.constant 0 : index
    %46 = vector.load %arg5[%c0_41, %c3_42, %c0_43, %c0_44] : memref<1x4x128x128xbf16, #tpu.memory_space<vmem>>, vector<1x1x128x128xbf16>
    %47 = vector.shape_cast %46 : vector<1x1x128x128xbf16> to vector<128x128xbf16>
    %48 = vector.shape_cast %45 : vector<128x128xbf16> to vector<1x1x128x128xbf16>
    tpu.vector_store %arg5[%c0_41, %c3_42, %c0_43, %c0_44], %48 {strides = array<i32>} : memref<1x4x128x128xbf16, #tpu.memory_space<vmem>>, vector<1x1x128x128xbf16>,
    %49 = vector.extract_strided_slice %4 {offsets = [0, 1408], sizes = [128, 128], strides = [1, 1]} : vector<128x1536xbf16> to vector<128x128xbf16>
    %c0_45 = arith.constant 0 : index
    %c3_46 = arith.constant 3 : index
    %c0_47 = arith.constant 0 : index
    %c0_48 = arith.constant 0 : index
    %50 = vector.load %arg6[%c0_45, %c3_46, %c0_47, %c0_48] : memref<1x4x128x128xbf16, #tpu.memory_space<vmem>>, vector<1x1x128x128xbf16>
    %51 = vector.shape_cast %50 : vector<1x1x128x128xbf16> to vector<128x128xbf16>
    %52 = vector.shape_cast %49 : vector<128x128xbf16> to vector<1x1x128x128xbf16>
    tpu.vector_store %arg6[%c0_45, %c3_46, %c0_47, %c0_48], %52 {strides = array<i32>} : memref<1x4x128x128xbf16, #tpu.memory_space<vmem>>, vector<1x1x128x128xbf16>,
    return
  }
  func.func @transform_0(%arg0: i32, %arg1: i32) -> (i32, i32, i32) {
    %c0_i32 = arith.constant 0 : i32
    %c0_i32_0 = arith.constant 0 : i32
    return %arg0, %arg1, %c0_i32 : i32, i32, i32
  }
  func.func @transform_1(%arg0: i32, %arg1: i32) -> (i32, i32) {
    %c0_i32 = arith.constant 0 : i32
    %c0_i32_0 = arith.constant 0 : i32
    %c0_i32_1 = arith.constant 0 : i32
    return %c0_i32, %c0_i32_0 : i32, i32
  }
  func.func @transform_2(%arg0: i32, %arg1: i32) -> (i32, i32, i32, i32) {
    %c0_i32 = arith.constant 0 : i32
    %c0_i32_0 = arith.constant 0 : i32
    %c0_i32_1 = arith.constant 0 : i32
    return %arg0, %c0_i32, %arg1, %c0_i32_0 : i32, i32, i32, i32
  }
  func.func @transform_3(%arg0: i32, %arg1: i32) -> (i32, i32, i32, i32) {
    %c0_i32 = arith.constant 0 : i32
    %c0_i32_0 = arith.constant 0 : i32
    %c0_i32_1 = arith.constant 0 : i32
    return %arg0, %c0_i32, %arg1, %c0_i32_0 : i32, i32, i32, i32
  }
  func.func @transform_4(%arg0: i32, %arg1: i32) -> (i32, i32, i32, i32) {
    %c0_i32 = arith.constant 0 : i32
    %c0_i32_0 = arith.constant 0 : i32
    %c0_i32_1 = arith.constant 0 : i32
    return %arg0, %c0_i32, %arg1, %c0_i32_0 : i32, i32, i32, i32
  }
}

</mosaic_0001>

<llo_original>
// kernel: tpu_custom_call.1
$region0: #{tpu_custom_call.1}
  #allocation0 [shape = 'u32[]', space=smem, size = 0x4, offset = 0x4, fixed_abs, tag = 'smem constant byte address 0x4 - core index']
  #allocation1 [shape = 'u32[144,128]{1,0:T(1,128)}', space=vmem, size = 0x12000, scoped, tag = 'internal scratch']
  %s0 = inlined_call_operand.hbm [shape: bf16[2,128,128], index: 0, kind: input, shape index: {}]
  %s1 = inlined_call_operand.hbm [shape: bf16[128,1536], index: 1, kind: input, shape index: {}]
  %s2 = inlined_call_operand.hbm [shape: bf16[2,4,128,128], index: 2, kind: output, shape index: {0}]
  %s3 = inlined_call_operand.hbm [shape: bf16[2,4,128,128], index: 3, kind: output, shape index: {1}]
  %s4 = inlined_call_operand.hbm [shape: bf16[2,4,128,128], index: 4, kind: output, shape index: {2}]
  %5 = xla_tuple %s2, %s3, %s4
  %s6 = sld [smem:[#allocation0]]
  $region65: #{tpu_custom_call.1} parent=0
    _
  %s8 = ssub.s32 1, %s6
  %s9 = scalar_select 0, %s8, %s6
  $region1: #{tpu_custom_call.1} parent=0
    #allocation2 [shape = 'u8[65536]{0}', space=vmem, size = 0x10000, scoped, tag = 'input window, operand 0']
    #allocation3 [shape = 's32[2]{0}', space=sflag, size = 0x8, scoped, tag = 'scoped memory for tpu_custom_call.1']
    #allocation4 [shape = 's32[2]{0}', space=sflag, size = 0x8, scoped, tag = 'scoped memory for tpu_custom_call.1']
    #allocation5 [shape = 'u8[393216]{0}', space=vmem, size = 0x60000, scoped, tag = 'input window, operand 1, single buffered']
    #allocation6 [shape = 's32[1]{0}', space=sflag, size = 0x4, scoped, tag = 'scoped memory for tpu_custom_call.1']
    #allocation7 [shape = 'u8[262144]{0}', space=vmem, size = 0x40000, scoped, tag = 'output window, operand 0']
    #allocation8 [shape = 'u8[262144]{0}', space=vmem, size = 0x40000, scoped, tag = 'output window, operand 1']
    #allocation9 [shape = 's32[2]{0}', space=sflag, size = 0x8, scoped, tag = 'scoped memory for tpu_custom_call.1']
    #allocation10 [shape = 'u8[262144]{0}', space=vmem, size = 0x40000, scoped, tag = 'output window, operand 2']
    %10 = vsyncpa [#allocation3], 0
    %s11 = scalar_lea.sflag [#allocation3], 1
    %12 = vsyncpa %s11, 0
    %13 = vsyncpa [#allocation6], 0
    %14 = vsyncpa [#allocation4], 0
    %s15 = scalar_lea.sflag [#allocation4], 1
    %16 = vsyncpa %s15, 0
    %17 = vsyncpa [#allocation9], 0
    %s18 = scalar_lea.sflag [#allocation9], 1
    %19 = vsyncpa %s18, 0
    loop: start=0, step=1, limit=4
    $region2: #{tpu_custom_call.1} parent=1 // loop_pre_header
      _
    $region3: #{tpu_custom_call.1} parent=1 // loop_header
      %s21 = sphi 0, %s25
      %p22 = scmp.ge.s32.totalorder %s21, 4
      %s28 = sphi 0, %s40
      %s29 = sphi 0, %s36
      %s30 = sphi 0, %s28
      %s31 = sphi 0, %s29
      %s32 = sphi 0, %s30
      %s33 = sphi 0, %s31
      %s45 = sphi 0, %s47
      %s48 = sphi 0, %s45
      %s49 = sphi 0, %s48
      %s65 = sphi 0, %s49
      %s69 = sphi 0, %s69
      %s71 = sphi 0, %s69
      %s72 = sphi 0, %s71
      %s86 = sphi 0, %s72
      %s94 = sphi 0, %s96
      %s97 = sphi 0, %s94
      %s98 = sphi 0, %s97
      %s114 = sphi 0, %s98
      %s122 = sphi 0, %s124
      %s125 = sphi 0, %s122
      %s126 = sphi 0, %s125
      %s142 = sphi 0, %s126
      %s150 = sphi 0, %s152
      %s153 = sphi 0, %s150
      %s154 = sphi 0, %s153
      %s170 = sphi 0, %s154
    $region4: #{tpu_custom_call.1} parent=1 // loop_header_branch
      %24 = sbr.rel (%p22) target = $region8
    $region5: #{tpu_custom_call.1} parent=1 // loop_body
      %s26 = ssub.s32 %s21, 1
      %s27 = ssub.s32 %s21, 2
      %s34 = sadd.s32 1, %s29
      %p35 = scmp.ge.s32.totalorder %s34, 1
      %s36 = scalar_select %p35, 0, %s34
      %s37 = sadd.s32 1, %s28
      %s38 = scalar_select %p35, %s37, %s28
      %p39 = scmp.ge.s32.totalorder %s38, 2
      %s40 = scalar_select %p39, 0, %s38
      %s41 = ssub.s32 %s28, %s40
      %s42 = ssub.s32 %s29, %s36
      %s43 = sor.u32 %s41, %s42
      %p44 = scmp.eq.s32.totalorder %s43, 0
      %s46 = sadd.s32 %s45, 1
      %s47 = scalar_select %p44, %s45, %s46
      %p50 = pneg %p44
      %p51 = scmp.eq.s32.totalorder %s21, 1
      %p52 = por %p50, %p51
      %p53 = scmp.ne.s32.totalorder %s45, %s48
      %p54 = scmp.eq.s32.totalorder %s21, 0
      %p55 = por %p53, %p54
      %p56 = scmp.ne.s32.totalorder %s45, %s48
      %p57 = scmp.eq.s32.totalorder %s26, 1
      %p58 = por %p56, %p57
      %p59 = scmp.ne.s32.totalorder %s48, %s49
      %p60 = scmp.eq.s32.totalorder %s26, 0
      %p61 = por %p59, %p60
      %p62 = scmp.ne.s32.totalorder %s48, %s49
      %p63 = scmp.eq.s32.totalorder %s27, 1
      %p64 = por %p62, %p63
      %p66 = scmp.ne.s32.totalorder %s49, %s65
      %p67 = scmp.eq.s32.totalorder %s27, 0
      %p68 = por %p66, %p67
      %s70 = sadd.s32 %s69, 1
      %p73 = scmp.eq.s32.totalorder %s21, 1
      %p74 = scmp.ne.s32.totalorder %s69, %s71
      %p75 = scmp.eq.s32.totalorder %s21, 0
      %p76 = por %p74, %p75
      %p77 = scmp.ne.s32.totalorder %s69, %s71
      %p78 = scmp.eq.s32.totalorder %s26, 1
      %p79 = por %p77, %p78
      %p80 = scmp.ne.s32.totalorder %s71, %s72
      %p81 = scmp.eq.s32.totalorder %s26, 0
      %p82 = por %p80, %p81
      %p83 = scmp.ne.s32.totalorder %s71, %s72
      %p84 = scmp.eq.s32.totalorder %s27, 1
      %p85 = por %p83, %p84
      %p87 = scmp.ne.s32.totalorder %s72, %s86
      %p88 = scmp.eq.s32.totalorder %s27, 0
      %p89 = por %p87, %p88
      %s90 = ssub.s32 %s28, %s40
      %s91 = ssub.s32 %s29, %s36
      %s92 = sor.u32 %s90, %s91
      %p93 = scmp.eq.s32.totalorder %s92, 0
      %s95 = sadd.s32 %s94, 1
      %s96 = scalar_select %p93, %s94, %s95
      %p99 = pneg %p93
      %p100 = scmp.eq.s32.totalorder %s21, 1
      %p101 = por %p99, %p100
      %p102 = scmp.ne.s32.totalorder %s94, %s97
      %p103 = scmp.eq.s32.totalorder %s21, 0
      %p104 = por %p102, %p103
      %p105 = scmp.ne.s32.totalorder %s94, %s97
      %p106 = scmp.eq.s32.totalorder %s26, 1
      %p107 = por %p105, %p106
      %p108 = scmp.ne.s32.totalorder %s97, %s98
      %p109 = scmp.eq.s32.totalorder %s26, 0
      %p110 = por %p108, %p109
      %p111 = scmp.ne.s32.totalorder %s97, %s98
      %p112 = scmp.eq.s32.totalorder %s27, 1
      %p113 = por %p111, %p112
      %p115 = scmp.ne.s32.totalorder %s98, %s114
      %p116 = scmp.eq.s32.totalorder %s27, 0
      %p117 = por %p115, %p116
      %s118 = ssub.s32 %s28, %s40
      %s119 = ssub.s32 %s29, %s36
      %s120 = sor.u32 %s118, %s119
      %p121 = scmp.eq.s32.totalorder %s120, 0
      %s123 = sadd.s32 %s122, 1
      %s124 = scalar_select %p121, %s122, %s123
      %p127 = pneg %p121
      %p128 = scmp.eq.s32.totalorder %s21, 1
      %p129 = por %p127, %p128
      %p130 = scmp.ne.s32.totalorder %s122, %s125
      %p131 = scmp.eq.s32.totalorder %s21, 0
      %p132 = por %p130, %p131
      %p133 = scmp.ne.s32.totalorder %s122, %s125
      %p134 = scmp.eq.s32.totalorder %s26, 1
      %p135 = por %p133, %p134
      %p136 = scmp.ne.s32.totalorder %s125, %s126
      %p137 = scmp.eq.s32.totalorder %s26, 0
      %p138 = por %p136, %p137
      %p139 = scmp.ne.s32.totalorder %s125, %s126
      %p140 = scmp.eq.s32.totalorder %s27, 1
      %p141 = por %p139, %p140
      %p143 = scmp.ne.s32.totalorder %s126, %s142
      %p144 = scmp.eq.s32.totalorder %s27, 0
      %p145 = por %p143, %p144
      %s146 = ssub.s32 %s28, %s40
      %s147 = ssub.s32 %s29, %s36
      %s148 = sor.u32 %s146, %s147
      %p149 = scmp.eq.s32.totalorder %s148, 0
      %s151 = sadd.s32 %s150, 1
      %s152 = scalar_select %p149, %s150, %s151
      %p155 = pneg %p149
      %p156 = scmp.eq.s32.totalorder %s21, 1
      %p157 = por %p155, %p156
      %p158 = scmp.ne.s32.totalorder %s150, %s153
      %p159 = scmp.eq.s32.totalorder %s21, 0
      %p160 = por %p158, %p159
      %p161 = scmp.ne.s32.totalorder %s150, %s153
      %p162 = scmp.eq.s32.totalorder %s26, 1
      %p163 = por %p161, %p162
      %p164 = scmp.ne.s32.totalorder %s153, %s154
      %p165 = scmp.eq.s32.totalorder %s26, 0
      %p166 = por %p164, %p165
      %p167 = scmp.ne.s32.totalorder %s153, %s154
      %p168 = scmp.eq.s32.totalorder %s27, 1
      %p169 = por %p167, %p168
      %p171 = scmp.ne.s32.totalorder %s154, %s170
      %p172 = scmp.eq.s32.totalorder %s27, 0
      %p173 = por %p171, %p172
      %p174 = scmp.le.s32.totalorder 1, %s21
      %p175 = scmp.lt.s32.totalorder %s21, 3
      %p176 = pnand %p174, %p175
      %p177 = pneg %p176
      // Predicated region
      $region9: #{tpu_custom_call.1} parent=5 // pred_check
        _
      $region10: #{tpu_custom_call.1} parent=5 // pred_check_branch
        %179 = sbr.rel (%p176) target = $region12
      $region11: #{tpu_custom_call.1} parent=5 // pred_region
        %s180 = ssub.s32 %s21, 1
        // Predicated region
        $region13: #{tpu_custom_call.1} parent=11 // pred_check
          %p181 = pneg %p82
        $region14: #{tpu_custom_call.1} parent=11 // pred_check_branch
          %183 = sbr.rel (%p181) target = $region16
        $region15: #{tpu_custom_call.1} parent=11 // pred_region
          %s185 = ssub.s32 12288, 12288
          %186 = vsyncadd [#allocation6], %s185
          %s187 = sshll.u32 [#allocation5], 4
          %s188 = int_to_ptr.vmem [resolvable:$true] %s187
          %193 = dma.hbm_to_vmem [thread:$0]  %s1, 12288, %s188, [#allocation6], 768, 768, 48
        $region16: #{tpu_custom_call.1} parent=11 // pred_fallthru
          _
      $region12: #{tpu_custom_call.1} parent=5 // pred_fallthru
        _
      %p194 = scmp.lt.s32.totalorder %s21, 2
      // Predicated region
      $region17: #{tpu_custom_call.1} parent=5 // pred_check
        %p195 = pneg %p194
      $region18: #{tpu_custom_call.1} parent=5 // pred_check_branch
        %197 = sbr.rel (%p195) target = $region20
      $region19: #{tpu_custom_call.1} parent=5 // pred_region
        // Predicated region
        $region21: #{tpu_custom_call.1} parent=19 // pred_check
          %p198 = pneg %p55
        $region22: #{tpu_custom_call.1} parent=19 // pred_check_branch
          %200 = sbr.rel (%p198) target = $region24
        $region23: #{tpu_custom_call.1} parent=19 // pred_region
          %s201 = sand.u32 %s45, 1
          %s202 = scalar_lea.sflag [#allocation3], %s201
          %s203 = sand.u32 %s45, 1
          %s204 = smul.addr %s203, 64
          %s205 = scalar_lea.vmem [#allocation2], %s204
          %s206 = smul.u32 16, %s29
          %s208 = ssub.s32 1024, 1024
          %209 = vsyncadd %s202, %s208
          %s210 = smul.addr %s28, 16
          %s211 = sadd.s32 %s206, %s210
          %s212 = smul.addr %s211, 64
          %s213 = scalar_lea.hbm %s0, %s212
          %s214 = sshll.u32 %s205, 4
          %s215 = int_to_ptr.vmem [resolvable:$true] %s214
          %220 = dma.hbm_to_vmem [thread:$0]  %s213, 1024, %s215, %s202, 64, 64, 4
        $region24: #{tpu_custom_call.1} parent=19 // pred_fallthru
          _
      $region20: #{tpu_custom_call.1} parent=5 // pred_fallthru
        _
      %p221 = scmp.le.s32.totalorder 1, %s21
      %p222 = scmp.lt.s32.totalorder %s21, 3
      %p223 = pnand %p221, %p222
      %p224 = pneg %p223
      // Predicated region
      $region25: #{tpu_custom_call.1} parent=5 // pred_check
        _
      $region26: #{tpu_custom_call.1} parent=5 // pred_check_branch
        %226 = sbr.rel (%p223) target = $region28
      $region27: #{tpu_custom_call.1} parent=5 // pred_region
        %s227 = ssub.s32 %s21, 1
        %s228 = sand.u32 %s48, 1
        %s229 = scalar_lea.sflag [#allocation3], %s228
        %s230 = sand.u32 %s48, 1
        %s231 = smul.addr %s230, 64
        %s232 = scalar_lea.vmem [#allocation2], %s231
        // Predicated region
        $region29: #{tpu_custom_call.1} parent=27 // pred_check
          %p233 = pneg %p61
        $region30: #{tpu_custom_call.1} parent=27 // pred_check_branch
          %235 = sbr.rel (%p233) target = $region32
        $region31: #{tpu_custom_call.1} parent=27 // pred_region
          %236 = dma.done %s229, 1024
        $region32: #{tpu_custom_call.1} parent=27 // pred_fallthru
          _
        // Predicated region
        $region33: #{tpu_custom_call.1} parent=27 // pred_check
          %p237 = pneg %p82
        $region34: #{tpu_custom_call.1} parent=27 // pred_check_branch
          %239 = sbr.rel (%p237) target = $region36
        $region35: #{tpu_custom_call.1} parent=27 // pred_region
          %240 = dma.done [#allocation6], 12288
        $region36: #{tpu_custom_call.1} parent=27 // pred_fallthru
          _
        %s241 = sand.u32 %s48, 1
        %s242 = scalar_lea.sflag [#allocation3], %s241
        %s243 = sand.u32 %s48, 1
        %s244 = smul.addr %s243, 64
        %s245 = scalar_lea.vmem [#allocation2], %s244
        %p246 = pneg %p61
        %p247 = pneg %p58
        %p248 = pneg %p82
        %p249 = pneg %p79
        %p250 = pneg %p110
        %p251 = pneg %p107
        %s252 = sand.u32 %s97, 1
        %s253 = scalar_lea.sflag [#allocation4], %s252
        %s254 = sand.u32 %s97, 1
        %s255 = smul.addr %s254, 256
        %s256 = scalar_lea.vmem [#allocation7], %s255
        %p257 = pneg %p138
        %p258 = pneg %p135
        %s259 = sand.u32 %s26, 1
        %s260 = scalar_lea.sflag [#allocation9], %s259
        %s261 = sand.u32 %s125, 1
        %s262 = smul.addr %s261, 256
        %s263 = scalar_lea.vmem [#allocation8], %s262
        %p264 = pneg %p166
        %p265 = pneg %p163
        %s266 = sand.u32 %s26, 1
        %s267 = scalar_lea.sflag [#allocation9], %s266
        %s268 = sand.u32 %s153, 1
        %s269 = smul.addr %s268, 256
        %s270 = scalar_lea.vmem [#allocation10], %s269
        %s271 = smul.u32 16, %s31
        %s272 = smul.u32 16, %s31
        %s273 = smul.u32 16, %s31
        %s274 = smul.u32 16, %s31
        %v276 = vld [vmem:[%s232] sm:$0xf]
        %v277 = vld [vmem:[%s232 + $0x4] sm:$0xf]
        %v278 = vld [vmem:[%s232 + $0x8] sm:$0xf]
        %v279 = vld [vmem:[%s232 + $0xc] sm:$0xf]
        %v280 = vld [vmem:[%s232 + $0x10] sm:$0xf]
        %v281 = vld [vmem:[%s232 + $0x14] sm:$0xf]
        %v282 = vld [vmem:[%s232 + $0x18] sm:$0xf]
        %v283 = vld [vmem:[%s232 + $0x1c] sm:$0xf]
        %v284 = vld [vmem:[%s232 + $0x20] sm:$0xf]
        %v285 = vld [vmem:[%s232 + $0x24] sm:$0xf]
        %v286 = vld [vmem:[%s232 + $0x28] sm:$0xf]
        %v287 = vld [vmem:[%s232 + $0x2c] sm:$0xf]
        %v288 = vld [vmem:[%s232 + $0x30] sm:$0xf]
        %v289 = vld [vmem:[%s232 + $0x34] sm:$0xf]
        %v290 = vld [vmem:[%s232 + $0x38] sm:$0xf]
        %v291 = vld [vmem:[%s232 + $0x3c] sm:$0xf]
        %v292 = vld [vmem:[#allocation5] sm:$0xff]
        %v293 = vld [vmem:[#allocation5 + $0x8] sm:$0xff]
        %v294 = vld [vmem:[#allocation5 + $0x10] sm:$0xff]
        %v295 = vld [vmem:[#allocation5 + $0x18] sm:$0xff]
        %v296 = vld [vmem:[#allocation5 + $0x20] sm:$0xff]
        %v297 = vld [vmem:[#allocation5 + $0x28] sm:$0xff]
        %v298 = vld [vmem:[#allocation5 + $0x30] sm:$0xff]
        %v299 = vld [vmem:[#allocation5 + $0x38] sm:$0xff]
        %v300 = vld [vmem:[#allocation5 + $0x40] sm:$0xff]
        %v301 = vld [vmem:[#allocation5 + $0x48] sm:$0xff]
        %v302 = vld [vmem:[#allocation5 + $0x50] sm:$0xff]
        %v303 = vld [vmem:[#allocation5 + $0x58] sm:$0xff]
        %v304 = vld [vmem:[#allocation5 + $0x60] sm:$0xff]
        %v305 = vld [vmem:[#allocation5 + $0x68] sm:$0xff]
        %v306 = vld [vmem:[#allocation5 + $0x70] sm:$0xff]
        %v307 = vld [vmem:[#allocation5 + $0x78] sm:$0xff]
        %v308 = vld [vmem:[#allocation5 + $0x80] sm:$0xff]
        %v309 = vld [vmem:[#allocation5 + $0x88] sm:$0xff]
        %v310 = vld [vmem:[#allocation5 + $0x90] sm:$0xff]
        %v311 = vld [vmem:[#allocation5 + $0x98] sm:$0xff]
        %v312 = vld [vmem:[#allocation5 + $0xa0] sm:$0xff]
        %v313 = vld [vmem:[#allocation5 + $0xa8] sm:$0xff]
        %v314 = vld [vmem:[#allocation5 + $0xb0] sm:$0xff]
        %v315 = vld [vmem:[#allocation5 + $0xb8] sm:$0xff]
        %v316 = vld [vmem:[#allocation5 + $0xc0] sm:$0xff]
        %v317 = vld [vmem:[#allocation5 + $0xc8] sm:$0xff]
        %v318 = vld [vmem:[#allocation5 + $0xd0] sm:$0xff]
        %v319 = vld [vmem:[#allocation5 + $0xd8] sm:$0xff]
        %v320 = vld [vmem:[#allocation5 + $0xe0] sm:$0xff]
        %v321 = vld [vmem:[#allocation5 + $0xe8] sm:$0xff]
        %v322 = vld [vmem:[#allocation5 + $0xf0] sm:$0xff]
        %v323 = vld [vmem:[#allocation5 + $0xf8] sm:$0xff]
        %v324 = vld [vmem:[#allocation5 + $0x100] sm:$0xff]
        %v325 = vld [vmem:[#allocation5 + $0x108] sm:$0xff]
        %v326 = vld [vmem:[#allocation5 + $0x110] sm:$0xff]
        %v327 = vld [vmem:[#allocation5 + $0x118] sm:$0xff]
        %v328 = vld [vmem:[#allocation5 + $0x120] sm:$0xff]
        %v329 = vld [vmem:[#allocation5 + $0x128] sm:$0xff]
        %v330 = vld [vmem:[#allocation5 + $0x130] sm:$0xff]
        %v331 = vld [vmem:[#allocation5 + $0x138] sm:$0xff]
        %v332 = vld [vmem:[#allocation5 + $0x140] sm:$0xff]
        %v333 = vld [vmem:[#allocation5 + $0x148] sm:$0xff]
        %v334 = vld [vmem:[#allocation5 + $0x150] sm:$0xff]
        %v335 = vld [vmem:[#allocation5 + $0x158] sm:$0xff]
        %v336 = vld [vmem:[#allocation5 + $0x160] sm:$0xff]
        %v337 = vld [vmem:[#allocation5 + $0x168] sm:$0xff]
        %v338 = vld [vmem:[#allocation5 + $0x170] sm:$0xff]
        %v339 = vld [vmem:[#allocation5 + $0x178] sm:$0xff]
        %v340 = vld [vmem:[#allocation5 + $0x180] sm:$0xff]
        %v341 = vld [vmem:[#allocation5 + $0x188] sm:$0xff]
        %v342 = vld [vmem:[#allocation5 + $0x190] sm:$0xff]
        %v343 = vld [vmem:[#allocation5 + $0x198] sm:$0xff]
        %v344 = vld [vmem:[#allocation5 + $0x1a0] sm:$0xff]
        %v345 = vld [vmem:[#allocation5 + $0x1a8] sm:$0xff]
        %v346 = vld [vmem:[#allocation5 + $0x1b0] sm:$0xff]
        %v347 = vld [vmem:[#allocation5 + $0x1b8] sm:$0xff]
        %v348 = vld [vmem:[#allocation5 + $0x1c0] sm:$0xff]
        %v349 = vld [vmem:[#allocation5 + $0x1c8] sm:$0xff]
        %v350 = vld [vmem:[#allocation5 + $0x1d0] sm:$0xff]
        %v351 = vld [vmem:[#allocation5 + $0x1d8] sm:$0xff]
        %v352 = vld [vmem:[#allocation5 + $0x1e0] sm:$0xff]
        %v353 = vld [vmem:[#allocation5 + $0x1e8] sm:$0xff]
        %v354 = vld [vmem:[#allocation5 + $0x1f0] sm:$0xff]
        %v355 = vld [vmem:[#allocation5 + $0x1f8] sm:$0xff]
        %v356 = vld [vmem:[#allocation5 + $0x200] sm:$0xff]
        %v357 = vld [vmem:[#allocation5 + $0x208] sm:$0xff]
        %v358 = vld [vmem:[#allocation5 + $0x210] sm:$0xff]
        %v359 = vld [vmem:[#allocation5 + $0x218] sm:$0xff]
        %v360 = vld [vmem:[#allocation5 + $0x220] sm:$0xff]
        %v361 = vld [vmem:[#allocation5 + $0x228] sm:$0xff]
        %v362 = vld [vmem:[#allocation5 + $0x230] sm:$0xff]
        %v363 = vld [vmem:[#allocation5 + $0x238] sm:$0xff]
        %v364 = vld [vmem:[#allocation5 + $0x240] sm:$0xff]
        %v365 = vld [vmem:[#allocation5 + $0x248] sm:$0xff]
        %v366 = vld [vmem:[#allocation5 + $0x250] sm:$0xff]
        %v367 = vld [vmem:[#allocation5 + $0x258] sm:$0xff]
        %v368 = vld [vmem:[#allocation5 + $0x260] sm:$0xff]
        %v369 = vld [vmem:[#allocation5 + $0x268] sm:$0xff]
        %v370 = vld [vmem:[#allocation5 + $0x270] sm:$0xff]
        %v371 = vld [vmem:[#allocation5 + $0x278] sm:$0xff]
        %v372 = vld [vmem:[#allocation5 + $0x280] sm:$0xff]
        %v373 = vld [vmem:[#allocation5 + $0x288] sm:$0xff]
        %v374 = vld [vmem:[#allocation5 + $0x290] sm:$0xff]
        %v375 = vld [vmem:[#allocation5 + $0x298] sm:$0xff]
        %v376 = vld [vmem:[#allocation5 + $0x2a0] sm:$0xff]
        %v377 = vld [vmem:[#allocation5 + $0x2a8] sm:$0xff]
        %v378 = vld [vmem:[#allocation5 + $0x2b0] sm:$0xff]
        %v379 = vld [vmem:[#allocation5 + $0x2b8] sm:$0xff]
        %v380 = vld [vmem:[#allocation5 + $0x2c0] sm:$0xff]
        %v381 = vld [vmem:[#allocation5 + $0x2c8] sm:$0xff]
        %v382 = vld [vmem:[#allocation5 + $0x2d0] sm:$0xff]
        %v383 = vld [vmem:[#allocation5 + $0x2d8] sm:$0xff]
        %v384 = vld [vmem:[#allocation5 + $0x2e0] sm:$0xff]
        %v385 = vld [vmem:[#allocation5 + $0x2e8] sm:$0xff]
        %v386 = vld [vmem:[#allocation5 + $0x2f0] sm:$0xff]
        %v387 = vld [vmem:[#allocation5 + $0x2f8] sm:$0xff]
        %v404 = vunpack.c.l.b16 %v276
        %v405 = vunpack.c.l.b16 %v277
        %v406 = vunpack.c.l.b16 %v278
        %v407 = vunpack.c.l.b16 %v279
        %v408 = vunpack.c.l.b16 %v280
        %v409 = vunpack.c.l.b16 %v281
        %v410 = vunpack.c.l.b16 %v282
        %v411 = vunpack.c.l.b16 %v283
        %v412 = vunpack.c.l.b16 %v284
        %v413 = vunpack.c.l.b16 %v285
        %v414 = vunpack.c.l.b16 %v286
        %v415 = vunpack.c.l.b16 %v287
        %v416 = vunpack.c.l.b16 %v288
        %v417 = vunpack.c.l.b16 %v289
        %v418 = vunpack.c.l.b16 %v290
        %v419 = vunpack.c.l.b16 %v291
        %v420 = vpack.c.b16 %v405, %v404
        %v421 = vpack.c.b16 %v407, %v406
        %v422 = vpack.c.b16 %v409, %v408
        %v423 = vpack.c.b16 %v411, %v410
        %v424 = vpack.c.b16 %v413, %v412
        %v425 = vpack.c.b16 %v415, %v414
        %v426 = vpack.c.b16 %v417, %v416
        %v427 = vpack.c.b16 %v419, %v418
        %v532 = vunpack.c.l.b16 %v292
        %v533 = vunpack.c.h.b16 %v292
        %v534 = vunpack.c.l.b16 %v293
        %v535 = vunpack.c.h.b16 %v293
        %v536 = vunpack.c.l.b16 %v294
        %v537 = vunpack.c.h.b16 %v294
        %v538 = vunpack.c.l.b16 %v295
        %v539 = vunpack.c.h.b16 %v295
        %v540 = vunpack.c.l.b16 %v296
        %v541 = vunpack.c.h.b16 %v296
        %v542 = vunpack.c.l.b16 %v297
        %v543 = vunpack.c.h.b16 %v297
        %v544 = vunpack.c.l.b16 %v298
        %v545 = vunpack.c.h.b16 %v298
        %v546 = vunpack.c.l.b16 %v299
        %v547 = vunpack.c.h.b16 %v299
        %v548 = vunpack.c.l.b16 %v300
        %v549 = vunpack.c.h.b16 %v300
        %v550 = vunpack.c.l.b16 %v301
        %v551 = vunpack.c.h.b16 %v301
        %v552 = vunpack.c.l.b16 %v302
        %v553 = vunpack.c.h.b16 %v302
        %v554 = vunpack.c.l.b16 %v303
        %v555 = vunpack.c.h.b16 %v303
        %v556 = vunpack.c.l.b16 %v304
        %v557 = vunpack.c.h.b16 %v304
        %v558 = vunpack.c.l.b16 %v305
        %v559 = vunpack.c.h.b16 %v305
        %v560 = vunpack.c.l.b16 %v306
        %v561 = vunpack.c.h.b16 %v306
        %v562 = vunpack.c.l.b16 %v307
        %v563 = vunpack.c.h.b16 %v307
        %v564 = vunpack.c.l.b16 %v308
        %v565 = vunpack.c.h.b16 %v308
        %v566 = vunpack.c.l.b16 %v309
        %v567 = vunpack.c.h.b16 %v309
        %v568 = vunpack.c.l.b16 %v310
        %v569 = vunpack.c.h.b16 %v310
        %v570 = vunpack.c.l.b16 %v311
        %v571 = vunpack.c.h.b16 %v311
        %v572 = vunpack.c.l.b16 %v312
        %v573 = vunpack.c.h.b16 %v312
        %v574 = vunpack.c.l.b16 %v313
        %v575 = vunpack.c.h.b16 %v313
        %v576 = vunpack.c.l.b16 %v314
        %v577 = vunpack.c.h.b16 %v314
        %v578 = vunpack.c.l.b16 %v315
        %v579 = vunpack.c.h.b16 %v315
        %v580 = vunpack.c.l.b16 %v316
        %v581 = vunpack.c.h.b16 %v316
        %v582 = vunpack.c.l.b16 %v317
        %v583 = vunpack.c.h.b16 %v317
        %v584 = vunpack.c.l.b16 %v318
        %v585 = vunpack.c.h.b16 %v318
        %v586 = vunpack.c.l.b16 %v319
        %v587 = vunpack.c.h.b16 %v319
        %v588 = vunpack.c.l.b16 %v320
        %v589 = vunpack.c.h.b16 %v320
        %v590 = vunpack.c.l.b16 %v321
        %v591 = vunpack.c.h.b16 %v321
        %v592 = vunpack.c.l.b16 %v322
        %v593 = vunpack.c.h.b16 %v322
        %v594 = vunpack.c.l.b16 %v323
        %v595 = vunpack.c.h.b16 %v323
        %v596 = vunpack.c.l.b16 %v324
        %v597 = vunpack.c.h.b16 %v324
        %v598 = vunpack.c.l.b16 %v325
        %v599 = vunpack.c.h.b16 %v325
        %v600 = vunpack.c.l.b16 %v326
        %v601 = vunpack.c.h.b16 %v326
        %v602 = vunpack.c.l.b16 %v327
        %v603 = vunpack.c.h.b16 %v327
        %v604 = vunpack.c.l.b16 %v328
        %v605 = vunpack.c.h.b16 %v328
        %v606 = vunpack.c.l.b16 %v329
        %v607 = vunpack.c.h.b16 %v329
        %v608 = vunpack.c.l.b16 %v330
        %v609 = vunpack.c.h.b16 %v330
        %v610 = vunpack.c.l.b16 %v331
        %v611 = vunpack.c.h.b16 %v331
        %v612 = vunpack.c.l.b16 %v332
        %v613 = vunpack.c.h.b16 %v332
        %v614 = vunpack.c.l.b16 %v333
        %v615 = vunpack.c.h.b16 %v333
        %v616 = vunpack.c.l.b16 %v334
        %v617 = vunpack.c.h.b16 %v334
        %v618 = vunpack.c.l.b16 %v335
        %v619 = vunpack.c.h.b16 %v335
        %v620 = vunpack.c.l.b16 %v336
        %v621 = vunpack.c.h.b16 %v336
        %v622 = vunpack.c.l.b16 %v337
        %v623 = vunpack.c.h.b16 %v337
        %v624 = vunpack.c.l.b16 %v338
        %v625 = vunpack.c.h.b16 %v338
        %v626 = vunpack.c.l.b16 %v339
        %v627 = vunpack.c.h.b16 %v339
        %v628 = vunpack.c.l.b16 %v340
        %v629 = vunpack.c.h.b16 %v340
        %v630 = vunpack.c.l.b16 %v341
        %v631 = vunpack.c.h.b16 %v341
        %v632 = vunpack.c.l.b16 %v342
        %v633 = vunpack.c.h.b16 %v342
        %v634 = vunpack.c.l.b16 %v343
        %v635 = vunpack.c.h.b16 %v343
        %v636 = vunpack.c.l.b16 %v344
        %v637 = vunpack.c.h.b16 %v344
        %v638 = vunpack.c.l.b16 %v345
        %v639 = vunpack.c.h.b16 %v345
        %v640 = vunpack.c.l.b16 %v346
        %v641 = vunpack.c.h.b16 %v346
        %v642 = vunpack.c.l.b16 %v347
        %v643 = vunpack.c.h.b16 %v347
        %v644 = vunpack.c.l.b16 %v348
        %v645 = vunpack.c.h.b16 %v348
        %v646 = vunpack.c.l.b16 %v349
        %v647 = vunpack.c.h.b16 %v349
        %v648 = vunpack.c.l.b16 %v350
        %v649 = vunpack.c.h.b16 %v350
        %v650 = vunpack.c.l.b16 %v351
        %v651 = vunpack.c.h.b16 %v351
        %v652 = vunpack.c.l.b16 %v352
        %v653 = vunpack.c.h.b16 %v352
        %v654 = vunpack.c.l.b16 %v353
        %v655 = vunpack.c.h.b16 %v353
        %v656 = vunpack.c.l.b16 %v354
        %v657 = vunpack.c.h.b16 %v354
        %v658 = vunpack.c.l.b16 %v355
        %v659 = vunpack.c.h.b16 %v355
        %v660 = vunpack.c.l.b16 %v356
        %v661 = vunpack.c.h.b16 %v356
        %v662 = vunpack.c.l.b16 %v357
        %v663 = vunpack.c.h.b16 %v357
        %v664 = vunpack.c.l.b16 %v358
        %v665 = vunpack.c.h.b16 %v358
        %v666 = vunpack.c.l.b16 %v359
        %v667 = vunpack.c.h.b16 %v359
        %v668 = vunpack.c.l.b16 %v360
        %v669 = vunpack.c.h.b16 %v360
        %v670 = vunpack.c.l.b16 %v361
        %v671 = vunpack.c.h.b16 %v361
        %v672 = vunpack.c.l.b16 %v362
        %v673 = vunpack.c.h.b16 %v362
        %v674 = vunpack.c.l.b16 %v363
        %v675 = vunpack.c.h.b16 %v363
        %v676 = vunpack.c.l.b16 %v364
        %v677 = vunpack.c.h.b16 %v364
        %v678 = vunpack.c.l.b16 %v365
        %v679 = vunpack.c.h.b16 %v365
        %v680 = vunpack.c.l.b16 %v366
        %v681 = vunpack.c.h.b16 %v366
        %v682 = vunpack.c.l.b16 %v367
        %v683 = vunpack.c.h.b16 %v367
        %v684 = vunpack.c.l.b16 %v368
        %v685 = vunpack.c.h.b16 %v368
        %v686 = vunpack.c.l.b16 %v369
        %v687 = vunpack.c.h.b16 %v369
        %v688 = vunpack.c.l.b16 %v370
        %v689 = vunpack.c.h.b16 %v370
        %v690 = vunpack.c.l.b16 %v371
        %v691 = vunpack.c.h.b16 %v371
        %v692 = vunpack.c.l.b16 %v372
        %v693 = vunpack.c.h.b16 %v372
        %v694 = vunpack.c.l.b16 %v373
        %v695 = vunpack.c.h.b16 %v373
        %v696 = vunpack.c.l.b16 %v374
        %v697 = vunpack.c.h.b16 %v374
        %v698 = vunpack.c.l.b16 %v375
        %v699 = vunpack.c.h.b16 %v375
        %v700 = vunpack.c.l.b16 %v376
        %v701 = vunpack.c.h.b16 %v376
        %v702 = vunpack.c.l.b16 %v377
        %v703 = vunpack.c.h.b16 %v377
        %v704 = vunpack.c.l.b16 %v378
        %v705 = vunpack.c.h.b16 %v378
        %v706 = vunpack.c.l.b16 %v379
        %v707 = vunpack.c.h.b16 %v379
        %v708 = vunpack.c.l.b16 %v380
        %v709 = vunpack.c.h.b16 %v380
        %v710 = vunpack.c.l.b16 %v381
        %v711 = vunpack.c.h.b16 %v381
        %v712 = vunpack.c.l.b16 %v382
        %v713 = vunpack.c.h.b16 %v382
        %v714 = vunpack.c.l.b16 %v383
        %v715 = vunpack.c.h.b16 %v383
        %v716 = vunpack.c.l.b16 %v384
        %v717 = vunpack.c.h.b16 %v384
        %v718 = vunpack.c.l.b16 %v385
        %v719 = vunpack.c.h.b16 %v385
        %v720 = vunpack.c.l.b16 %v386
        %v721 = vunpack.c.h.b16 %v386
        %v722 = vunpack.c.l.b16 %v387
        %v723 = vunpack.c.h.b16 %v387
        %v724 = vpack.c.b16 %v544, %v532
        %v725 = vpack.c.b16 %v545, %v533
        %v726 = vpack.c.b16 %v546, %v534
        %v727 = vpack.c.b16 %v547, %v535
        %v728 = vpack.c.b16 %v548, %v536
        %v729 = vpack.c.b16 %v549, %v537
        %v730 = vpack.c.b16 %v550, %v538
        %v731 = vpack.c.b16 %v551, %v539
        %v732 = vpack.c.b16 %v552, %v540
        %v733 = vpack.c.b16 %v553, %v541
        %v734 = vpack.c.b16 %v554, %v542
        %v735 = vpack.c.b16 %v555, %v543
        %v736 = vpack.c.b16 %v568, %v556
        %v737 = vpack.c.b16 %v569, %v557
        %v738 = vpack.c.b16 %v570, %v558
        %v739 = vpack.c.b16 %v571, %v559
        %v740 = vpack.c.b16 %v572, %v560
        %v741 = vpack.c.b16 %v573, %v561
        %v742 = vpack.c.b16 %v574, %v562
        %v743 = vpack.c.b16 %v575, %v563
        %v744 = vpack.c.b16 %v576, %v564
        %v745 = vpack.c.b16 %v577, %v565
        %v746 = vpack.c.b16 %v578, %v566
        %v747 = vpack.c.b16 %v579, %v567
        %v748 = vpack.c.b16 %v592, %v580
        %v749 = vpack.c.b16 %v593, %v581
        %v750 = vpack.c.b16 %v594, %v582
        %v751 = vpack.c.b16 %v595, %v583
        %v752 = vpack.c.b16 %v596, %v584
        %v753 = vpack.c.b16 %v597, %v585
        %v754 = vpack.c.b16 %v598, %v586
        %v755 = vpack.c.b16 %v599, %v587
        %v756 = vpack.c.b16 %v600, %v588
        %v757 = vpack.c.b16 %v601, %v589
        %v758 = vpack.c.b16 %v602, %v590
        %v759 = vpack.c.b16 %v603, %v591
        %v760 = vpack.c.b16 %v616, %v604
        %v761 = vpack.c.b16 %v617, %v605
        %v762 = vpack.c.b16 %v618, %v606
        %v763 = vpack.c.b16 %v619, %v607
        %v764 = vpack.c.b16 %v620, %v608
        %v765 = vpack.c.b16 %v621, %v609
        %v766 = vpack.c.b16 %v622, %v610
        %v767 = vpack.c.b16 %v623, %v611
        %v768 = vpack.c.b16 %v624, %v612
        %v769 = vpack.c.b16 %v625, %v613
        %v770 = vpack.c.b16 %v626, %v614
        %v771 = vpack.c.b16 %v627, %v615
        %v772 = vpack.c.b16 %v640, %v628
        %v773 = vpack.c.b16 %v641, %v629
        %v774 = vpack.c.b16 %v642, %v630
        %v775 = vpack.c.b16 %v643, %v631
        %v776 = vpack.c.b16 %v644, %v632
        %v777 = vpack.c.b16 %v645, %v633
        %v778 = vpack.c.b16 %v646, %v634
        %v779 = vpack.c.b16 %v647, %v635
        %v780 = vpack.c.b16 %v648, %v636
        %v781 = vpack.c.b16 %v649, %v637
        %v782 = vpack.c.b16 %v650, %v638
        %v783 = vpack.c.b16 %v651, %v639
        %v784 = vpack.c.b16 %v664, %v652
        %v785 = vpack.c.b16 %v665, %v653
        %v786 = vpack.c.b16 %v666, %v654
        %v787 = vpack.c.b16 %v667, %v655
        %v788 = vpack.c.b16 %v668, %v656
        %v789 = vpack.c.b16 %v669, %v657
        %v790 = vpack.c.b16 %v670, %v658
        %v791 = vpack.c.b16 %v671, %v659
        %v792 = vpack.c.b16 %v672, %v660
        %v793 = vpack.c.b16 %v673, %v661
        %v794 = vpack.c.b16 %v674, %v662
        %v795 = vpack.c.b16 %v675, %v663
        %v796 = vpack.c.b16 %v688, %v676
        %v797 = vpack.c.b16 %v689, %v677
        %v798 = vpack.c.b16 %v690, %v678
        %v799 = vpack.c.b16 %v691, %v679
        %v800 = vpack.c.b16 %v692, %v680
        %v801 = vpack.c.b16 %v693, %v681
        %v802 = vpack.c.b16 %v694, %v682
        %v803 = vpack.c.b16 %v695, %v683
        %v804 = vpack.c.b16 %v696, %v684
        %v805 = vpack.c.b16 %v697, %v685
        %v806 = vpack.c.b16 %v698, %v686
        %v807 = vpack.c.b16 %v699, %v687
        %v808 = vpack.c.b16 %v712, %v700
        %v809 = vpack.c.b16 %v713, %v701
        %v810 = vpack.c.b16 %v714, %v702
        %v811 = vpack.c.b16 %v715, %v703
        %v812 = vpack.c.b16 %v716, %v704
        %v813 = vpack.c.b16 %v717, %v705
        %v814 = vpack.c.b16 %v718, %v706
        %v815 = vpack.c.b16 %v719, %v707
        %v816 = vpack.c.b16 %v720, %v708
        %v817 = vpack.c.b16 %v721, %v709
        %v818 = vpack.c.b16 %v722, %v710
        %v819 = vpack.c.b16 %v723, %v711
        %916 = vmatprep.subr.bf16.mxu0 %v725
        %917 = vmatpush1.bf16.msra.mxu0 %v724
        %918 = vmatprep.subr.bf16.mxu0 %v737
        %919 = vmatpush1.bf16.msra.mxu0 %v736
        %920 = vmatprep.subr.bf16.mxu0 %v749
        %921 = vmatpush1.bf16.msra.mxu0 %v748
        %922 = vmatprep.subr.bf16.mxu0 %v761
        %923 = vmatpush1.bf16.msra.mxu0 %v760
        %924 = vmatprep.subr.bf16.mxu0 %v773
        %925 = vmatpush1.bf16.msra.mxu0 %v772
        %926 = vmatprep.subr.bf16.mxu0 %v785
        %927 = vmatpush1.bf16.msra.mxu0 %v784
        %928 = vmatprep.subr.bf16.mxu0 %v797
        %929 = vmatpush1.bf16.msra.mxu0 %v796
        %930 = vmatprep.subr.bf16.mxu0 %v809
        %931 = vmatpush1.bf16.msra.mxu0 %v808
        %932 = vmatprep.subr.bf16.mxu0 0
        %933 = vmatpush1.bf16.msra.mxu0 0
        %934 = vmatprep.subr.bf16.mxu0 0
        %935 = vmatpush1.bf16.msra.mxu0 0
        %936 = vmatprep.subr.bf16.mxu0 0
        %937 = vmatpush1.bf16.msra.mxu0 0
        %938 = vmatprep.subr.bf16.mxu0 0
        %939 = vmatpush1.bf16.msra.mxu0 0
        %940 = vmatprep.subr.bf16.mxu0 0
        %941 = vmatpush1.bf16.msra.mxu0 0
        %942 = vmatprep.subr.bf16.mxu0 0
        %943 = vmatpush1.bf16.msra.mxu0 0
        %944 = vmatprep.subr.bf16.mxu0 0
        %945 = vmatpush1.bf16.msra.mxu0 0
        %946 = vmatprep.subr.bf16.mxu0 0
        %947 = vmatpush1.bf16.msra.mxu0 0
        %948 = vmatprep.mubr.bf16.mxu0 0
        %949 = vmatmul.mubr.bf16.gmra.mrb[0].mxu0 %v420
        %v950 = vpop.f32.mrb[0].mxu0
        %v951 = vadd.f32 0.0, %v950
        %v952 = vpop.f32.mrb[0].mxu0
        %v953 = vadd.f32 0.0, %v952
        %v954 = vpop.f32.mrb[0].mxu0
        %v955 = vadd.f32 0.0, %v954
        %v956 = vpop.f32.mrb[0].mxu0
        %v957 = vadd.f32 0.0, %v956
        %958 = vmatprep.mubr.bf16.mxu0 0
        %959 = vmatmul.mubr.bf16.gmra.mrb[0].mxu0 %v421
        %v960 = vpop.f32.mrb[0].mxu0
        %v961 = vadd.f32 0.0, %v960
        %v962 = vpop.f32.mrb[0].mxu0
        %v963 = vadd.f32 0.0, %v962
        %v964 = vpop.f32.mrb[0].mxu0
        %v965 = vadd.f32 0.0, %v964
        %v966 = vpop.f32.mrb[0].mxu0
        %v967 = vadd.f32 0.0, %v966
        %968 = vmatprep.mubr.bf16.mxu0 0
        %969 = vmatmul.mubr.bf16.gmra.mrb[0].mxu0 %v422
        %v970 = vpop.f32.mrb[0].mxu0
        %v971 = vadd.f32 0.0, %v970
        %v972 = vpop.f32.mrb[0].mxu0
        %v973 = vadd.f32 0.0, %v972
        %v974 = vpop.f32.mrb[0].mxu0
        %v975 = vadd.f32 0.0, %v974
        %v976 = vpop.f32.mrb[0].mxu0
        %v977 = vadd.f32 0.0, %v976
        %978 = vmatprep.mubr.bf16.mxu0 0
        %979 = vmatmul.mubr.bf16.gmra.mrb[0].mxu0 %v423
        %v980 = vpop.f32.mrb[0].mxu0
        %v981 = vadd.f32 0.0, %v980
        %v982 = vpop.f32.mrb[0].mxu0
        %v983 = vadd.f32 0.0, %v982
        %v984 = vpop.f32.mrb[0].mxu0
        %v985 = vadd.f32 0.0, %v984
        %v986 = vpop.f32.mrb[0].mxu0
        %v987 = vadd.f32 0.0, %v986
        %988 = vmatprep.mubr.bf16.mxu0 0
        %989 = vmatmul.mubr.bf16.gmra.mrb[0].mxu0 %v424
        %v990 = vpop.f32.mrb[0].mxu0
        %v991 = vadd.f32 0.0, %v990
        %v992 = vpop.f32.mrb[0].mxu0
        %v993 = vadd.f32 0.0, %v992
        %v994 = vpop.f32.mrb[0].mxu0
        %v995 = vadd.f32 0.0, %v994
        %v996 = vpop.f32.mrb[0].mxu0
        %v997 = vadd.f32 0.0, %v996
        %998 = vmatprep.mubr.bf16.mxu0 0
        %999 = vmatmul.mubr.bf16.gmra.mrb[0].mxu0 %v425
        %v1000 = vpop.f32.mrb[0].mxu0
        %v1001 = vadd.f32 0.0, %v1000
        %v1002 = vpop.f32.mrb[0].mxu0
        %v1003 = vadd.f32 0.0, %v1002
        %v1004 = vpop.f32.mrb[0].mxu0
        %v1005 = vadd.f32 0.0, %v1004
        %v1006 = vpop.f32.mrb[0].mxu0
        %v1007 = vadd.f32 0.0, %v1006
        %1008 = vmatprep.mubr.bf16.mxu0 0
        %1009 = vmatmul.mubr.bf16.gmra.mrb[0].mxu0 %v426
        %v1010 = vpop.f32.mrb[0].mxu0
        %v1011 = vadd.f32 0.0, %v1010
        %v1012 = vpop.f32.mrb[0].mxu0
        %v1013 = vadd.f32 0.0, %v1012
        %v1014 = vpop.f32.mrb[0].mxu0
        %v1015 = vadd.f32 0.0, %v1014
        %v1016 = vpop.f32.mrb[0].mxu0
        %v1017 = vadd.f32 0.0, %v1016
        %1018 = vmatprep.mubr.bf16.mxu0 0
        %1019 = vmatmul.mubr.bf16.gmra.mrb[0].mxu0 %v427
        %v1020 = vpop.f32.mrb[0].mxu0
        %v1021 = vadd.f32 0.0, %v1020
        %v1022 = vpop.f32.mrb[0].mxu0
        %v1023 = vadd.f32 0.0, %v1022
        %v1024 = vpop.f32.mrb[0].mxu0
        %v1025 = vadd.f32 0.0, %v1024
        %v1026 = vpop.f32.mrb[0].mxu0
        %v1027 = vadd.f32 0.0, %v1026
        %1028 = vdwg.mxu0
        %1029 = vmatprep.subr.bf16.mxu0 %v727
        %1030 = vmatpush1.bf16.msra.mxu0 %v726
        %1031 = vmatprep.subr.bf16.mxu0 %v739
        %1032 = vmatpush1.bf16.msra.mxu0 %v738
        %1033 = vmatprep.subr.bf16.mxu0 %v751
        %1034 = vmatpush1.bf16.msra.mxu0 %v750
        %1035 = vmatprep.subr.bf16.mxu0 %v763
        %1036 = vmatpush1.bf16.msra.mxu0 %v762
        %1037 = vmatprep.subr.bf16.mxu0 %v775
        %1038 = vmatpush1.bf16.msra.mxu0 %v774
        %1039 = vmatprep.subr.bf16.mxu0 %v787
        %1040 = vmatpush1.bf16.msra.mxu0 %v786
        %1041 = vmatprep.subr.bf16.mxu0 %v799
        %1042 = vmatpush1.bf16.msra.mxu0 %v798
        %1043 = vmatprep.subr.bf16.mxu0 %v811
        %1044 = vmatpush1.bf16.msra.mxu0 %v810
        %1045 = vmatprep.subr.bf16.mxu0 0
        %1046 = vmatpush1.bf16.msra.mxu0 0
        %1047 = vmatprep.subr.bf16.mxu0 0
        %1048 = vmatpush1.bf16.msra.mxu0 0
        %1049 = vmatprep.subr.bf16.mxu0 0
        %1050 = vmatpush1.bf16.msra.mxu0 0
        %1051 = vmatprep.subr.bf16.mxu0 0
        %1052 = vmatpush1.bf16.msra.mxu0 0
        %1053 = vmatprep.subr.bf16.mxu0 0
        %1054 = vmatpush1.bf16.msra.mxu0 0
        %1055 = vmatprep.subr.bf16.mxu0 0
        %1056 = vmatpush1.bf16.msra.mxu0 0
        %1057 = vmatprep.subr.bf16.mxu0 0
        %1058 = vmatpush1.bf16.msra.mxu0 0
        %1059 = vmatprep.subr.bf16.mxu0 0
        %1060 = vmatpush1.bf16.msra.mxu0 0
        %1061 = vmatprep.mubr.bf16.mxu0 0
        %1062 = vmatmul.mubr.bf16.gmra.mrb[0].mxu0 %v420
        %v1063 = vpop.f32.mrb[0].mxu0
        %v1064 = vadd.f32 0.0, %v1063
        %v1065 = vpop.f32.mrb[0].mxu0
        %v1066 = vadd.f32 0.0, %v1065
        %v1067 = vpop.f32.mrb[0].mxu0
        %v1068 = vadd.f32 0.0, %v1067
        %v1069 = vpop.f32.mrb[0].mxu0
        %v1070 = vadd.f32 0.0, %v1069
        %1071 = vmatprep.mubr.bf16.mxu0 0
        %1072 = vmatmul.mubr.bf16.gmra.mrb[0].mxu0 %v421
        %v1073 = vpop.f32.mrb[0].mxu0
        %v1074 = vadd.f32 0.0, %v1073
        %v1075 = vpop.f32.mrb[0].mxu0
        %v1076 = vadd.f32 0.0, %v1075
        %v1077 = vpop.f32.mrb[0].mxu0
        %v1078 = vadd.f32 0.0, %v1077
        %v1079 = vpop.f32.mrb[0].mxu0
        %v1080 = vadd.f32 0.0, %v1079
        %1081 = vmatprep.mubr.bf16.mxu0 0
        %1082 = vmatmul.mubr.bf16.gmra.mrb[0].mxu0 %v422
        %v1083 = vpop.f32.mrb[0].mxu0
        %v1084 = vadd.f32 0.0, %v1083
        %v1085 = vpop.f32.mrb[0].mxu0
        %v1086 = vadd.f32 0.0, %v1085
        %v1087 = vpop.f32.mrb[0].mxu0
        %v1088 = vadd.f32 0.0, %v1087
        %v1089 = vpop.f32.mrb[0].mxu0
        %v1090 = vadd.f32 0.0, %v1089
        %1091 = vmatprep.mubr.bf16.mxu0 0
        %1092 = vmatmul.mubr.bf16.gmra.mrb[0].mxu0 %v423
        %v1093 = vpop.f32.mrb[0].mxu0
        %v1094 = vadd.f32 0.0, %v1093
        %v1095 = vpop.f32.mrb[0].mxu0
        %v1096 = vadd.f32 0.0, %v1095
        %v1097 = vpop.f32.mrb[0].mxu0
        %v1098 = vadd.f32 0.0, %v1097
        %v1099 = vpop.f32.mrb[0].mxu0
        %v1100 = vadd.f32 0.0, %v1099
        %1101 = vmatprep.mubr.bf16.mxu0 0
        %1102 = vmatmul.mubr.bf16.gmra.mrb[0].mxu0 %v424
        %v1103 = vpop.f32.mrb[0].mxu0
        %v1104 = vadd.f32 0.0, %v1103
        %v1105 = vpop.f32.mrb[0].mxu0
        %v1106 = vadd.f32 0.0, %v1105
        %v1107 = vpop.f32.mrb[0].mxu0
        %v1108 = vadd.f32 0.0, %v1107
        %v1109 = vpop.f32.mrb[0].mxu0
        %v1110 = vadd.f32 0.0, %v1109
        %1111 = vmatprep.mubr.bf16.mxu0 0
        %1112 = vmatmul.mubr.bf16.gmra.mrb[0].mxu0 %v425
        %v1113 = vpop.f32.mrb[0].mxu0
        %v1114 = vadd.f32 0.0, %v1113
        %v1115 = vpop.f32.mrb[0].mxu0
        %v1116 = vadd.f32 0.0, %v1115
        %v1117 = vpop.f32.mrb[0].mxu0
        %v1118 = vadd.f32 0.0, %v1117
        %v1119 = vpop.f32.mrb[0].mxu0
        %v1120 = vadd.f32 0.0, %v1119
        %1121 = vmatprep.mubr.bf16.mxu0 0
        %1122 = vmatmul.mubr.bf16.gmra.mrb[0].mxu0 %v426
        %v1123 = vpop.f32.mrb[0].mxu0
        %v1124 = vadd.f32 0.0, %v1123
        %v1125 = vpop.f32.mrb[0].mxu0
        %v1126 = vadd.f32 0.0, %v1125
        %v1127 = vpop.f32.mrb[0].mxu0
        %v1128 = vadd.f32 0.0, %v1127
        %v1129 = vpop.f32.mrb[0].mxu0
        %v1130 = vadd.f32 0.0, %v1129
        %1131 = vmatprep.mubr.bf16.mxu0 0
        %1132 = vmatmul.mubr.bf16.gmra.mrb[0].mxu0 %v427
        %v1133 = vpop.f32.mrb[0].mxu0
        %v1134 = vadd.f32 0.0, %v1133
        %v1135 = vpop.f32.mrb[0].mxu0
        %v1136 = vadd.f32 0.0, %v1135
        %v1137 = vpop.f32.mrb[0].mxu0
        %v1138 = vadd.f32 0.0, %v1137
        %v1139 = vpop.f32.mrb[0].mxu0
        %v1140 = vadd.f32 0.0, %v1139
        %1141 = vdwg.mxu0
        %1142 = vmatprep.subr.bf16.mxu0 %v729
        %1143 = vmatpush1.bf16.msra.mxu0 %v728
        %1144 = vmatprep.subr.bf16.mxu0 %v741
        %1145 = vmatpush1.bf16.msra.mxu0 %v740
        %1146 = vmatprep.subr.bf16.mxu0 %v753
        %1147 = vmatpush1.bf16.msra.mxu0 %v752
        %1148 = vmatprep.subr.bf16.mxu0 %v765
        %1149 = vmatpush1.bf16.msra.mxu0 %v764
        %1150 = vmatprep.subr.bf16.mxu0 %v777
        %1151 = vmatpush1.bf16.msra.mxu0 %v776
        %1152 = vmatprep.subr.bf16.mxu0 %v789
        %1153 = vmatpush1.bf16.msra.mxu0 %v788
        %1154 = vmatprep.subr.bf16.mxu0 %v801
        %1155 = vmatpush1.bf16.msra.mxu0 %v800
        %1156 = vmatprep.subr.bf16.mxu0 %v813
        %1157 = vmatpush1.bf16.msra.mxu0 %v812
        %1158 = vmatprep.subr.bf16.mxu0 0
        %1159 = vmatpush1.bf16.msra.mxu0 0
        %1160 = vmatprep.subr.bf16.mxu0 0
        %1161 = vmatpush1.bf16.msra.mxu0 0
        %1162 = vmatprep.subr.bf16.mxu0 0
        %1163 = vmatpush1.bf16.msra.mxu0 0
        %1164 = vmatprep.subr.bf16.mxu0 0
        %1165 = vmatpush1.bf16.msra.mxu0 0
        %1166 = vmatprep.subr.bf16.mxu0 0
        %1167 = vmatpush1.bf16.msra.mxu0 0
        %1168 = vmatprep.subr.bf16.mxu0 0
        %1169 = vmatpush1.bf16.msra.mxu0 0
        %1170 = vmatprep.subr.bf16.mxu0 0
        %1171 = vmatpush1.bf16.msra.mxu0 0
        %1172 = vmatprep.subr.bf16.mxu0 0
        %1173 = vmatpush1.bf16.msra.mxu0 0
        %1174 = vmatprep.mubr.bf16.mxu0 0
        %1175 = vmatmul.mubr.bf16.gmra.mrb[0].mxu0 %v420
        %v1176 = vpop.f32.mrb[0].mxu0
        %v1177 = vadd.f32 0.0, %v1176
        %v1178 = vpop.f32.mrb[0].mxu0
        %v1179 = vadd.f32 0.0, %v1178
        %v1180 = vpop.f32.mrb[0].mxu0
        %v1181 = vadd.f32 0.0, %v1180
        %v1182 = vpop.f32.mrb[0].mxu0
        %v1183 = vadd.f32 0.0, %v1182
        %1184 = vmatprep.mubr.bf16.mxu0 0
        %1185 = vmatmul.mubr.bf16.gmra.mrb[0].mxu0 %v421
        %v1186 = vpop.f32.mrb[0].mxu0
        %v1187 = vadd.f32 0.0, %v1186
        %v1188 = vpop.f32.mrb[0].mxu0
        %v1189 = vadd.f32 0.0, %v1188
        %v1190 = vpop.f32.mrb[0].mxu0
        %v1191 = vadd.f32 0.0, %v1190
        %v1192 = vpop.f32.mrb[0].mxu0
        %v1193 = vadd.f32 0.0, %v1192
        %1194 = vmatprep.mubr.bf16.mxu0 0
        %1195 = vmatmul.mubr.bf16.gmra.mrb[0].mxu0 %v422
        %v1196 = vpop.f32.mrb[0].mxu0
        %v1197 = vadd.f32 0.0, %v1196
        %v1198 = vpop.f32.mrb[0].mxu0
        %v1199 = vadd.f32 0.0, %v1198
        %v1200 = vpop.f32.mrb[0].mxu0
        %v1201 = vadd.f32 0.0, %v1200
        %v1202 = vpop.f32.mrb[0].mxu0
        %v1203 = vadd.f32 0.0, %v1202
        %1204 = vmatprep.mubr.bf16.mxu0 0
        %1205 = vmatmul.mubr.bf16.gmra.mrb[0].mxu0 %v423
        %v1206 = vpop.f32.mrb[0].mxu0
        %v1207 = vadd.f32 0.0, %v1206
        %v1208 = vpop.f32.mrb[0].mxu0
        %v1209 = vadd.f32 0.0, %v1208
        %v1210 = vpop.f32.mrb[0].mxu0
        %v1211 = vadd.f32 0.0, %v1210
        %v1212 = vpop.f32.mrb[0].mxu0
        %v1213 = vadd.f32 0.0, %v1212
        %1214 = vmatprep.mubr.bf16.mxu0 0
        %1215 = vmatmul.mubr.bf16.gmra.mrb[0].mxu0 %v424
        %v1216 = vpop.f32.mrb[0].mxu0
        %v1217 = vadd.f32 0.0, %v1216
        %v1218 = vpop.f32.mrb[0].mxu0
        %v1219 = vadd.f32 0.0, %v1218
        %v1220 = vpop.f32.mrb[0].mxu0
        %v1221 = vadd.f32 0.0, %v1220
        %v1222 = vpop.f32.mrb[0].mxu0
        %v1223 = vadd.f32 0.0, %v1222
        %1224 = vmatprep.mubr.bf16.mxu0 0
        %1225 = vmatmul.mubr.bf16.gmra.mrb[0].mxu0 %v425
        %v1226 = vpop.f32.mrb[0].mxu0
        %v1227 = vadd.f32 0.0, %v1226
        %v1228 = vpop.f32.mrb[0].mxu0
        %v1229 = vadd.f32 0.0, %v1228
        %v1230 = vpop.f32.mrb[0].mxu0
        %v1231 = vadd.f32 0.0, %v1230
        %v1232 = vpop.f32.mrb[0].mxu0
        %v1233 = vadd.f32 0.0, %v1232
        %1234 = vmatprep.mubr.bf16.mxu0 0
        %1235 = vmatmul.mubr.bf16.gmra.mrb[0].mxu0 %v426
        %v1236 = vpop.f32.mrb[0].mxu0
        %v1237 = vadd.f32 0.0, %v1236
        %v1238 = vpop.f32.mrb[0].mxu0
        %v1239 = vadd.f32 0.0, %v1238
        %v1240 = vpop.f32.mrb[0].mxu0
        %v1241 = vadd.f32 0.0, %v1240
        %v1242 = vpop.f32.mrb[0].mxu0
        %v1243 = vadd.f32 0.0, %v1242
        %1244 = vmatprep.mubr.bf16.mxu0 0
        %1245 = vmatmul.mubr.bf16.gmra.mrb[0].mxu0 %v427
        %v1246 = vpop.f32.mrb[0].mxu0
        %v1247 = vadd.f32 0.0, %v1246
        %v1248 = vpop.f32.mrb[0].mxu0
        %v1249 = vadd.f32 0.0, %v1248
        %v1250 = vpop.f32.mrb[0].mxu0
        %v1251 = vadd.f32 0.0, %v1250
        %v1252 = vpop.f32.mrb[0].mxu0
        %v1253 = vadd.f32 0.0, %v1252
        %1254 = vdwg.mxu0
        %1255 = vmatprep.subr.bf16.mxu0 %v731
        %1256 = vmatpush1.bf16.msra.mxu0 %v730
        %1257 = vmatprep.subr.bf16.mxu0 %v743
        %1258 = vmatpush1.bf16.msra.mxu0 %v742
        %1259 = vmatprep.subr.bf16.mxu0 %v755
        %1260 = vmatpush1.bf16.msra.mxu0 %v754
        %1261 = vmatprep.subr.bf16.mxu0 %v767
        %1262 = vmatpush1.bf16.msra.mxu0 %v766
        %1263 = vmatprep.subr.bf16.mxu0 %v779
        %1264 = vmatpush1.bf16.msra.mxu0 %v778
        %1265 = vmatprep.subr.bf16.mxu0 %v791
        %1266 = vmatpush1.bf16.msra.mxu0 %v790
        %1267 = vmatprep.subr.bf16.mxu0 %v803
        %1268 = vmatpush1.bf16.msra.mxu0 %v802
        %1269 = vmatprep.subr.bf16.mxu0 %v815
        %1270 = vmatpush1.bf16.msra.mxu0 %v814
        %1271 = vmatprep.subr.bf16.mxu0 0
        %1272 = vmatpush1.bf16.msra.mxu0 0
        %1273 = vmatprep.subr.bf16.mxu0 0
        %1274 = vmatpush1.bf16.msra.mxu0 0
        %1275 = vmatprep.subr.bf16.mxu0 0
        %1276 = vmatpush1.bf16.msra.mxu0 0
        %1277 = vmatprep.subr.bf16.mxu0 0
        %1278 = vmatpush1.bf16.msra.mxu0 0
        %1279 = vmatprep.subr.bf16.mxu0 0
        %1280 = vmatpush1.bf16.msra.mxu0 0
        %1281 = vmatprep.subr.bf16.mxu0 0
        %1282 = vmatpush1.bf16.msra.mxu0 0
        %1283 = vmatprep.subr.bf16.mxu0 0
        %1284 = vmatpush1.bf16.msra.mxu0 0
        %1285 = vmatprep.subr.bf16.mxu0 0
        %1286 = vmatpush1.bf16.msra.mxu0 0
        %1287 = vmatprep.mubr.bf16.mxu0 0
        %1288 = vmatmul.mubr.bf16.gmra.mrb[0].mxu0 %v420
        %v1289 = vpop.f32.mrb[0].mxu0
        %v1290 = vadd.f32 0.0, %v1289
        %v1291 = vpop.f32.mrb[0].mxu0
        %v1292 = vadd.f32 0.0, %v1291
        %v1293 = vpop.f32.mrb[0].mxu0
        %v1294 = vadd.f32 0.0, %v1293
        %v1295 = vpop.f32.mrb[0].mxu0
        %v1296 = vadd.f32 0.0, %v1295
        %1297 = vmatprep.mubr.bf16.mxu0 0
        %1298 = vmatmul.mubr.bf16.gmra.mrb[0].mxu0 %v421
        %v1299 = vpop.f32.mrb[0].mxu0
        %v1300 = vadd.f32 0.0, %v1299
        %v1301 = vpop.f32.mrb[0].mxu0
        %v1302 = vadd.f32 0.0, %v1301
        %v1303 = vpop.f32.mrb[0].mxu0
        %v1304 = vadd.f32 0.0, %v1303
        %v1305 = vpop.f32.mrb[0].mxu0
        %v1306 = vadd.f32 0.0, %v1305
        %1307 = vmatprep.mubr.bf16.mxu0 0
        %1308 = vmatmul.mubr.bf16.gmra.mrb[0].mxu0 %v422
        %v1309 = vpop.f32.mrb[0].mxu0
        %v1310 = vadd.f32 0.0, %v1309
        %v1311 = vpop.f32.mrb[0].mxu0
        %v1312 = vadd.f32 0.0, %v1311
        %v1313 = vpop.f32.mrb[0].mxu0
        %v1314 = vadd.f32 0.0, %v1313
        %v1315 = vpop.f32.mrb[0].mxu0
        %v1316 = vadd.f32 0.0, %v1315
        %1317 = vmatprep.mubr.bf16.mxu0 0
        %1318 = vmatmul.mubr.bf16.gmra.mrb[0].mxu0 %v423
        %v1319 = vpop.f32.mrb[0].mxu0
        %v1320 = vadd.f32 0.0, %v1319
        %v1321 = vpop.f32.mrb[0].mxu0
        %v1322 = vadd.f32 0.0, %v1321
        %v1323 = vpop.f32.mrb[0].mxu0
        %v1324 = vadd.f32 0.0, %v1323
        %v1325 = vpop.f32.mrb[0].mxu0
        %v1326 = vadd.f32 0.0, %v1325
        %1327 = vmatprep.mubr.bf16.mxu0 0
        %1328 = vmatmul.mubr.bf16.gmra.mrb[0].mxu0 %v424
        %v1329 = vpop.f32.mrb[0].mxu0
        %v1330 = vadd.f32 0.0, %v1329
        %v1331 = vpop.f32.mrb[0].mxu0
        %v1332 = vadd.f32 0.0, %v1331
        %v1333 = vpop.f32.mrb[0].mxu0
        %v1334 = vadd.f32 0.0, %v1333
        %v1335 = vpop.f32.mrb[0].mxu0
        %v1336 = vadd.f32 0.0, %v1335
        %1337 = vmatprep.mubr.bf16.mxu0 0
        %1338 = vmatmul.mubr.bf16.gmra.mrb[0].mxu0 %v425
        %v1339 = vpop.f32.mrb[0].mxu0
        %v1340 = vadd.f32 0.0, %v1339
        %v1341 = vpop.f32.mrb[0].mxu0
        %v1342 = vadd.f32 0.0, %v1341
        %v1343 = vpop.f32.mrb[0].mxu0
        %v1344 = vadd.f32 0.0, %v1343
        %v1345 = vpop.f32.mrb[0].mxu0
        %v1346 = vadd.f32 0.0, %v1345
        %1347 = vmatprep.mubr.bf16.mxu0 0
        %1348 = vmatmul.mubr.bf16.gmra.mrb[0].mxu0 %v426
        %v1349 = vpop.f32.mrb[0].mxu0
        %v1350 = vadd.f32 0.0, %v1349
        %v1351 = vpop.f32.mrb[0].mxu0
        %v1352 = vadd.f32 0.0, %v1351
        %v1353 = vpop.f32.mrb[0].mxu0
        %v1354 = vadd.f32 0.0, %v1353
        %v1355 = vpop.f32.mrb[0].mxu0
        %v1356 = vadd.f32 0.0, %v1355
        %1357 = vmatprep.mubr.bf16.mxu0 0
        %1358 = vmatmul.mubr.bf16.gmra.mrb[0].mxu0 %v427
        %v1359 = vpop.f32.mrb[0].mxu0
        %v1360 = vadd.f32 0.0, %v1359
        %v1361 = vpop.f32.mrb[0].mxu0
        %v1362 = vadd.f32 0.0, %v1361
        %v1363 = vpop.f32.mrb[0].mxu0
        %v1364 = vadd.f32 0.0, %v1363
        %v1365 = vpop.f32.mrb[0].mxu0
        %v1366 = vadd.f32 0.0, %v1365
        %1367 = vdwg.mxu0
        %1368 = vmatprep.subr.bf16.mxu0 %v733
        %1369 = vmatpush1.bf16.msra.mxu0 %v732
        %1370 = vmatprep.subr.bf16.mxu0 %v745
        %1371 = vmatpush1.bf16.msra.mxu0 %v744
        %1372 = vmatprep.subr.bf16.mxu0 %v757
        %1373 = vmatpush1.bf16.msra.mxu0 %v756
        %1374 = vmatprep.subr.bf16.mxu0 %v769
        %1375 = vmatpush1.bf16.msra.mxu0 %v768
        %1376 = vmatprep.subr.bf16.mxu0 %v781
        %1377 = vmatpush1.bf16.msra.mxu0 %v780
        %1378 = vmatprep.subr.bf16.mxu0 %v793
        %1379 = vmatpush1.bf16.msra.mxu0 %v792
        %1380 = vmatprep.subr.bf16.mxu0 %v805
        %1381 = vmatpush1.bf16.msra.mxu0 %v804
        %1382 = vmatprep.subr.bf16.mxu0 %v817
        %1383 = vmatpush1.bf16.msra.mxu0 %v816
        %1384 = vmatprep.subr.bf16.mxu0 0
        %1385 = vmatpush1.bf16.msra.mxu0 0
        %1386 = vmatprep.subr.bf16.mxu0 0
        %1387 = vmatpush1.bf16.msra.mxu0 0
        %1388 = vmatprep.subr.bf16.mxu0 0
        %1389 = vmatpush1.bf16.msra.mxu0 0
        %1390 = vmatprep.subr.bf16.mxu0 0
        %1391 = vmatpush1.bf16.msra.mxu0 0
        %1392 = vmatprep.subr.bf16.mxu0 0
        %1393 = vmatpush1.bf16.msra.mxu0 0
        %1394 = vmatprep.subr.bf16.mxu0 0
        %1395 = vmatpush1.bf16.msra.mxu0 0
        %1396 = vmatprep.subr.bf16.mxu0 0
        %1397 = vmatpush1.bf16.msra.mxu0 0
        %1398 = vmatprep.subr.bf16.mxu0 0
        %1399 = vmatpush1.bf16.msra.mxu0 0
        %1400 = vmatprep.mubr.bf16.mxu0 0
        %1401 = vmatmul.mubr.bf16.gmra.mrb[0].mxu0 %v420
        %v1402 = vpop.f32.mrb[0].mxu0
        %v1403 = vadd.f32 0.0, %v1402
        %v1404 = vpop.f32.mrb[0].mxu0
        %v1405 = vadd.f32 0.0, %v1404
        %v1406 = vpop.f32.mrb[0].mxu0
        %v1407 = vadd.f32 0.0, %v1406
        %v1408 = vpop.f32.mrb[0].mxu0
        %v1409 = vadd.f32 0.0, %v1408
        %1410 = vmatprep.mubr.bf16.mxu0 0
        %1411 = vmatmul.mubr.bf16.gmra.mrb[0].mxu0 %v421
        %v1412 = vpop.f32.mrb[0].mxu0
        %v1413 = vadd.f32 0.0, %v1412
        %v1414 = vpop.f32.mrb[0].mxu0
        %v1415 = vadd.f32 0.0, %v1414
        %v1416 = vpop.f32.mrb[0].mxu0
        %v1417 = vadd.f32 0.0, %v1416
        %v1418 = vpop.f32.mrb[0].mxu0
        %v1419 = vadd.f32 0.0, %v1418
        %1420 = vmatprep.mubr.bf16.mxu0 0
        %1421 = vmatmul.mubr.bf16.gmra.mrb[0].mxu0 %v422
        %v1422 = vpop.f32.mrb[0].mxu0
        %v1423 = vadd.f32 0.0, %v1422
        %v1424 = vpop.f32.mrb[0].mxu0
        %v1425 = vadd.f32 0.0, %v1424
        %v1426 = vpop.f32.mrb[0].mxu0
        %v1427 = vadd.f32 0.0, %v1426
        %v1428 = vpop.f32.mrb[0].mxu0
        %v1429 = vadd.f32 0.0, %v1428
        %1430 = vmatprep.mubr.bf16.mxu0 0
        %1431 = vmatmul.mubr.bf16.gmra.mrb[0].mxu0 %v423
        %v1432 = vpop.f32.mrb[0].mxu0
        %v1433 = vadd.f32 0.0, %v1432
        %v1434 = vpop.f32.mrb[0].mxu0
        %v1435 = vadd.f32 0.0, %v1434
        %v1436 = vpop.f32.mrb[0].mxu0
        %v1437 = vadd.f32 0.0, %v1436
        %v1438 = vpop.f32.mrb[0].mxu0
        %v1439 = vadd.f32 0.0, %v1438
        %1440 = vmatprep.mubr.bf16.mxu0 0
        %1441 = vmatmul.mubr.bf16.gmra.mrb[0].mxu0 %v424
        %v1442 = vpop.f32.mrb[0].mxu0
        %v1443 = vadd.f32 0.0, %v1442
        %v1444 = vpop.f32.mrb[0].mxu0
        %v1445 = vadd.f32 0.0, %v1444
        %v1446 = vpop.f32.mrb[0].mxu0
        %v1447 = vadd.f32 0.0, %v1446
        %v1448 = vpop.f32.mrb[0].mxu0
        %v1449 = vadd.f32 0.0, %v1448
        %1450 = vmatprep.mubr.bf16.mxu0 0
        %1451 = vmatmul.mubr.bf16.gmra.mrb[0].mxu0 %v425
        %v1452 = vpop.f32.mrb[0].mxu0
        %v1453 = vadd.f32 0.0, %v1452
        %v1454 = vpop.f32.mrb[0].mxu0
        %v1455 = vadd.f32 0.0, %v1454
        %v1456 = vpop.f32.mrb[0].mxu0
        %v1457 = vadd.f32 0.0, %v1456
        %v1458 = vpop.f32.mrb[0].mxu0
        %v1459 = vadd.f32 0.0, %v1458
        %1460 = vmatprep.mubr.bf16.mxu0 0
        %1461 = vmatmul.mubr.bf16.gmra.mrb[0].mxu0 %v426
        %v1462 = vpop.f32.mrb[0].mxu0
        %v1463 = vadd.f32 0.0, %v1462
        %v1464 = vpop.f32.mrb[0].mxu0
        %v1465 = vadd.f32 0.0, %v1464
        %v1466 = vpop.f32.mrb[0].mxu0
        %v1467 = vadd.f32 0.0, %v1466
        %v1468 = vpop.f32.mrb[0].mxu0
        %v1469 = vadd.f32 0.0, %v1468
        %1470 = vmatprep.mubr.bf16.mxu0 0
        %1471 = vmatmul.mubr.bf16.gmra.mrb[0].mxu0 %v427
        %v1472 = vpop.f32.mrb[0].mxu0
        %v1473 = vadd.f32 0.0, %v1472
        %v1474 = vpop.f32.mrb[0].mxu0
        %v1475 = vadd.f32 0.0, %v1474
        %v1476 = vpop.f32.mrb[0].mxu0
        %v1477 = vadd.f32 0.0, %v1476
        %v1478 = vpop.f32.mrb[0].mxu0
        %v1479 = vadd.f32 0.0, %v1478
        %1480 = vdwg.mxu0
        %1481 = vmatprep.subr.bf16.mxu0 %v735
        %1482 = vmatpush1.bf16.msra.mxu0 %v734
        %1483 = vmatprep.subr.bf16.mxu0 %v747
        %1484 = vmatpush1.bf16.msra.mxu0 %v746
        %1485 = vmatprep.subr.bf16.mxu0 %v759
        %1486 = vmatpush1.bf16.msra.mxu0 %v758
        %1487 = vmatprep.subr.bf16.mxu0 %v771
        %1488 = vmatpush1.bf16.msra.mxu0 %v770
        %1489 = vmatprep.subr.bf16.mxu0 %v783
        %1490 = vmatpush1.bf16.msra.mxu0 %v782
        %1491 = vmatprep.subr.bf16.mxu0 %v795
        %1492 = vmatpush1.bf16.msra.mxu0 %v794
        %1493 = vmatprep.subr.bf16.mxu0 %v807
        %1494 = vmatpush1.bf16.msra.mxu0 %v806
        %1495 = vmatprep.subr.bf16.mxu0 %v819
        %1496 = vmatpush1.bf16.msra.mxu0 %v818
        %1497 = vmatprep.subr.bf16.mxu0 0
        %1498 = vmatpush1.bf16.msra.mxu0 0
        %1499 = vmatprep.subr.bf16.mxu0 0
        %1500 = vmatpush1.bf16.msra.mxu0 0
        %1501 = vmatprep.subr.bf16.mxu0 0
        %1502 = vmatpush1.bf16.msra.mxu0 0
        %1503 = vmatprep.subr.bf16.mxu0 0
        %1504 = vmatpush1.bf16.msra.mxu0 0
        %1505 = vmatprep.subr.bf16.mxu0 0
        %1506 = vmatpush1.bf16.msra.mxu0 0
        %1507 = vmatprep.subr.bf16.mxu0 0
        %1508 = vmatpush1.bf16.msra.mxu0 0
        %1509 = vmatprep.subr.bf16.mxu0 0
        %1510 = vmatpush1.bf16.msra.mxu0 0
        %1511 = vmatprep.subr.bf16.mxu0 0
        %1512 = vmatpush1.bf16.msra.mxu0 0
        %1513 = vmatprep.mubr.bf16.mxu0 0
        %1514 = vmatmul.mubr.bf16.gmra.mrb[0].mxu0 %v420
        %v1515 = vpop.f32.mrb[0].mxu0
        %v1516 = vadd.f32 0.0, %v1515
        %v1517 = vpop.f32.mrb[0].mxu0
        %v1518 = vadd.f32 0.0, %v1517
        %v1519 = vpop.f32.mrb[0].mxu0
        %v1520 = vadd.f32 0.0, %v1519
        %v1521 = vpop.f32.mrb[0].mxu0
        %v1522 = vadd.f32 0.0, %v1521
        %1523 = vmatprep.mubr.bf16.mxu0 0
        %1524 = vmatmul.mubr.bf16.gmra.mrb[0].mxu0 %v421
        %v1525 = vpop.f32.mrb[0].mxu0
        %v1526 = vadd.f32 0.0, %v1525
        %v1527 = vpop.f32.mrb[0].mxu0
        %v1528 = vadd.f32 0.0, %v1527
        %v1529 = vpop.f32.mrb[0].mxu0
        %v1530 = vadd.f32 0.0, %v1529
        %v1531 = vpop.f32.mrb[0].mxu0
        %v1532 = vadd.f32 0.0, %v1531
        %1533 = vmatprep.mubr.bf16.mxu0 0
        %1534 = vmatmul.mubr.bf16.gmra.mrb[0].mxu0 %v422
        %v1535 = vpop.f32.mrb[0].mxu0
        %v1536 = vadd.f32 0.0, %v1535
        %v1537 = vpop.f32.mrb[0].mxu0
        %v1538 = vadd.f32 0.0, %v1537
        %v1539 = vpop.f32.mrb[0].mxu0
        %v1540 = vadd.f32 0.0, %v1539
        %v1541 = vpop.f32.mrb[0].mxu0
        %v1542 = vadd.f32 0.0, %v1541
        %1543 = vmatprep.mubr.bf16.mxu0 0
        %1544 = vmatmul.mubr.bf16.gmra.mrb[0].mxu0 %v423
        %v1545 = vpop.f32.mrb[0].mxu0
        %v1546 = vadd.f32 0.0, %v1545
        %v1547 = vpop.f32.mrb[0].mxu0
        %v1548 = vadd.f32 0.0, %v1547
        %v1549 = vpop.f32.mrb[0].mxu0
        %v1550 = vadd.f32 0.0, %v1549
        %v1551 = vpop.f32.mrb[0].mxu0
        %v1552 = vadd.f32 0.0, %v1551
        %1553 = vmatprep.mubr.bf16.mxu0 0
        %1554 = vmatmul.mubr.bf16.gmra.mrb[0].mxu0 %v424
        %v1555 = vpop.f32.mrb[0].mxu0
        %v1556 = vadd.f32 0.0, %v1555
        %v1557 = vpop.f32.mrb[0].mxu0
        %v1558 = vadd.f32 0.0, %v1557
        %v1559 = vpop.f32.mrb[0].mxu0
        %v1560 = vadd.f32 0.0, %v1559
        %v1561 = vpop.f32.mrb[0].mxu0
        %v1562 = vadd.f32 0.0, %v1561
        %1563 = vmatprep.mubr.bf16.mxu0 0
        %1564 = vmatmul.mubr.bf16.gmra.mrb[0].mxu0 %v425
        %v1565 = vpop.f32.mrb[0].mxu0
        %v1566 = vadd.f32 0.0, %v1565
        %v1567 = vpop.f32.mrb[0].mxu0
        %v1568 = vadd.f32 0.0, %v1567
        %v1569 = vpop.f32.mrb[0].mxu0
        %v1570 = vadd.f32 0.0, %v1569
        %v1571 = vpop.f32.mrb[0].mxu0
        %v1572 = vadd.f32 0.0, %v1571
        %1573 = vmatprep.mubr.bf16.mxu0 0
        %1574 = vmatmul.mubr.bf16.gmra.mrb[0].mxu0 %v426
        %v1575 = vpop.f32.mrb[0].mxu0
        %v1576 = vadd.f32 0.0, %v1575
        %v1577 = vpop.f32.mrb[0].mxu0
        %v1578 = vadd.f32 0.0, %v1577
        %v1579 = vpop.f32.mrb[0].mxu0
        %v1580 = vadd.f32 0.0, %v1579
        %v1581 = vpop.f32.mrb[0].mxu0
        %v1582 = vadd.f32 0.0, %v1581
        %1583 = vmatprep.mubr.bf16.mxu0 0
        %1584 = vmatmul.mubr.bf16.gmra.mrb[0].mxu0 %v427
        %v1585 = vpop.f32.mrb[0].mxu0
        %v1586 = vadd.f32 0.0, %v1585
        %v1587 = vpop.f32.mrb[0].mxu0
        %v1588 = vadd.f32 0.0, %v1587
        %v1589 = vpop.f32.mrb[0].mxu0
        %v1590 = vadd.f32 0.0, %v1589
        %v1591 = vpop.f32.mrb[0].mxu0
        %v1592 = vadd.f32 0.0, %v1591
        %1593 = vdwg.mxu0
        %v1594 = vpack.c.bf16 %v955, %v951
        %v1595 = vpack.c.bf16 %v957, %v953
        %v1596 = vpack.c.bf16 %v1068, %v1064
        %v1597 = vpack.c.bf16 %v1070, %v1066
        %v1598 = vpack.c.bf16 %v1181, %v1177
        %v1599 = vpack.c.bf16 %v1183, %v1179
        %v1600 = vpack.c.bf16 %v1294, %v1290
        %v1601 = vpack.c.bf16 %v1296, %v1292
        %v1602 = vpack.c.bf16 %v1407, %v1403
        %v1603 = vpack.c.bf16 %v1409, %v1405
        %v1604 = vpack.c.bf16 %v1520, %v1516
        %v1605 = vpack.c.bf16 %v1522, %v1518
        %v1606 = vpack.c.bf16 %v965, %v961
        %v1607 = vpack.c.bf16 %v967, %v963
        %v1608 = vpack.c.bf16 %v1078, %v1074
        %v1609 = vpack.c.bf16 %v1080, %v1076
        %v1610 = vpack.c.bf16 %v1191, %v1187
        %v1611 = vpack.c.bf16 %v1193, %v1189
        %v1612 = vpack.c.bf16 %v1304, %v1300
        %v1613 = vpack.c.bf16 %v1306, %v1302
        %v1614 = vpack.c.bf16 %v1417, %v1413
        %v1615 = vpack.c.bf16 %v1419, %v1415
        %v1616 = vpack.c.bf16 %v1530, %v1526
        %v1617 = vpack.c.bf16 %v1532, %v1528
        %v1618 = vpack.c.bf16 %v975, %v971
        %v1619 = vpack.c.bf16 %v977, %v973
        %v1620 = vpack.c.bf16 %v1088, %v1084
        %v1621 = vpack.c.bf16 %v1090, %v1086
        %v1622 = vpack.c.bf16 %v1201, %v1197
        %v1623 = vpack.c.bf16 %v1203, %v1199
        %v1624 = vpack.c.bf16 %v1314, %v1310
        %v1625 = vpack.c.bf16 %v1316, %v1312
        %v1626 = vpack.c.bf16 %v1427, %v1423
        %v1627 = vpack.c.bf16 %v1429, %v1425
        %v1628 = vpack.c.bf16 %v1540, %v1536
        %v1629 = vpack.c.bf16 %v1542, %v1538
        %v1630 = vpack.c.bf16 %v985, %v981
        %v1631 = vpack.c.bf16 %v987, %v983
        %v1632 = vpack.c.bf16 %v1098, %v1094
        %v1633 = vpack.c.bf16 %v1100, %v1096
        %v1634 = vpack.c.bf16 %v1211, %v1207
        %v1635 = vpack.c.bf16 %v1213, %v1209
        %v1636 = vpack.c.bf16 %v1324, %v1320
        %v1637 = vpack.c.bf16 %v1326, %v1322
        %v1638 = vpack.c.bf16 %v1437, %v1433
        %v1639 = vpack.c.bf16 %v1439, %v1435
        %v1640 = vpack.c.bf16 %v1550, %v1546
        %v1641 = vpack.c.bf16 %v1552, %v1548
        %v1642 = vpack.c.bf16 %v995, %v991
        %v1643 = vpack.c.bf16 %v997, %v993
        %v1644 = vpack.c.bf16 %v1108, %v1104
        %v1645 = vpack.c.bf16 %v1110, %v1106
        %v1646 = vpack.c.bf16 %v1221, %v1217
        %v1647 = vpack.c.bf16 %v1223, %v1219
        %v1648 = vpack.c.bf16 %v1334, %v1330
        %v1649 = vpack.c.bf16 %v1336, %v1332
        %v1650 = vpack.c.bf16 %v1447, %v1443
        %v1651 = vpack.c.bf16 %v1449, %v1445
        %v1652 = vpack.c.bf16 %v1560, %v1556
        %v1653 = vpack.c.bf16 %v1562, %v1558
        %v1654 = vpack.c.bf16 %v1005, %v1001
        %v1655 = vpack.c.bf16 %v1007, %v1003
        %v1656 = vpack.c.bf16 %v1118, %v1114
        %v1657 = vpack.c.bf16 %v1120, %v1116
        %v1658 = vpack.c.bf16 %v1231, %v1227
        %v1659 = vpack.c.bf16 %v1233, %v1229
        %v1660 = vpack.c.bf16 %v1344, %v1340
        %v1661 = vpack.c.bf16 %v1346, %v1342
        %v1662 = vpack.c.bf16 %v1457, %v1453
        %v1663 = vpack.c.bf16 %v1459, %v1455
        %v1664 = vpack.c.bf16 %v1570, %v1566
        %v1665 = vpack.c.bf16 %v1572, %v1568
        %v1666 = vpack.c.bf16 %v1015, %v1011
        %v1667 = vpack.c.bf16 %v1017, %v1013
        %v1668 = vpack.c.bf16 %v1128, %v1124
        %v1669 = vpack.c.bf16 %v1130, %v1126
        %v1670 = vpack.c.bf16 %v1241, %v1237
        %v1671 = vpack.c.bf16 %v1243, %v1239
        %v1672 = vpack.c.bf16 %v1354, %v1350
        %v1673 = vpack.c.bf16 %v1356, %v1352
        %v1674 = vpack.c.bf16 %v1467, %v1463
        %v1675 = vpack.c.bf16 %v1469, %v1465
        %v1676 = vpack.c.bf16 %v1580, %v1576
        %v1677 = vpack.c.bf16 %v1582, %v1578
        %v1678 = vpack.c.bf16 %v1025, %v1021
        %v1679 = vpack.c.bf16 %v1027, %v1023
        %v1680 = vpack.c.bf16 %v1138, %v1134
        %v1681 = vpack.c.bf16 %v1140, %v1136
        %v1682 = vpack.c.bf16 %v1251, %v1247
        %v1683 = vpack.c.bf16 %v1253, %v1249
        %v1684 = vpack.c.bf16 %v1364, %v1360
        %v1685 = vpack.c.bf16 %v1366, %v1362
        %v1686 = vpack.c.bf16 %v1477, %v1473
        %v1687 = vpack.c.bf16 %v1479, %v1475
        %v1688 = vpack.c.bf16 %v1590, %v1586
        %v1689 = vpack.c.bf16 %v1592, %v1588
        %v1698 = vunpack.c.l.b16 %v1594
        %v1699 = vunpack.c.h.b16 %v1594
        %v1700 = vunpack.c.l.b16 %v1606
        %v1701 = vunpack.c.h.b16 %v1606
        %v1702 = vunpack.c.l.b16 %v1618
        %v1703 = vunpack.c.h.b16 %v1618
        %v1704 = vunpack.c.l.b16 %v1630
        %v1705 = vunpack.c.h.b16 %v1630
        %v1706 = vunpack.c.l.b16 %v1642
        %v1707 = vunpack.c.h.b16 %v1642
        %v1708 = vunpack.c.l.b16 %v1654
        %v1709 = vunpack.c.h.b16 %v1654
        %v1710 = vunpack.c.l.b16 %v1666
        %v1711 = vunpack.c.h.b16 %v1666
        %v1712 = vunpack.c.l.b16 %v1678
        %v1713 = vunpack.c.h.b16 %v1678
        %v1714 = vpack.c.b16 %v1698, %v1698
        %v1715 = vpack.c.b16 %v1699, %v1699
        %v1716 = vpack.c.b16 %v1700, %v1700
        %v1717 = vpack.c.b16 %v1701, %v1701
        %v1718 = vpack.c.b16 %v1702, %v1702
        %v1719 = vpack.c.b16 %v1703, %v1703
        %v1720 = vpack.c.b16 %v1704, %v1704
        %v1721 = vpack.c.b16 %v1705, %v1705
        %v1722 = vpack.c.b16 %v1706, %v1706
        %v1723 = vpack.c.b16 %v1707, %v1707
        %v1724 = vpack.c.b16 %v1708, %v1708
        %v1725 = vpack.c.b16 %v1709, %v1709
        %v1726 = vpack.c.b16 %v1710, %v1710
        %v1727 = vpack.c.b16 %v1711, %v1711
        %v1728 = vpack.c.b16 %v1712, %v1712
        %v1729 = vpack.c.b16 %v1713, %v1713
        %1746 = vst [vmem:[%s256] sm:$0xf] %v1714
        %1747 = vst [vmem:[%s256 + $0x4] sm:$0xf] %v1715
        %1748 = vst [vmem:[%s256 + $0x8] sm:$0xf] %v1716
        %1749 = vst [vmem:[%s256 + $0xc] sm:$0xf] %v1717
        %1750 = vst [vmem:[%s256 + $0x10] sm:$0xf] %v1718
        %1751 = vst [vmem:[%s256 + $0x14] sm:$0xf] %v1719
        %1752 = vst [vmem:[%s256 + $0x18] sm:$0xf] %v1720
        %1753 = vst [vmem:[%s256 + $0x1c] sm:$0xf] %v1721
        %1754 = vst [vmem:[%s256 + $0x20] sm:$0xf] %v1722
        %1755 = vst [vmem:[%s256 + $0x24] sm:$0xf] %v1723
        %1756 = vst [vmem:[%s256 + $0x28] sm:$0xf] %v1724
        %1757 = vst [vmem:[%s256 + $0x2c] sm:$0xf] %v1725
        %1758 = vst [vmem:[%s256 + $0x30] sm:$0xf] %v1726
        %1759 = vst [vmem:[%s256 + $0x34] sm:$0xf] %v1727
        %1760 = vst [vmem:[%s256 + $0x38] sm:$0xf] %v1728
        %1761 = vst [vmem:[%s256 + $0x3c] sm:$0xf] %v1729
        %v1770 = vunpack.c.l.b16 %v1598
        %v1771 = vunpack.c.h.b16 %v1598
        %v1772 = vunpack.c.l.b16 %v1610
        %v1773 = vunpack.c.h.b16 %v1610
        %v1774 = vunpack.c.l.b16 %v1622
        %v1775 = vunpack.c.h.b16 %v1622
        %v1776 = vunpack.c.l.b16 %v1634
        %v1777 = vunpack.c.h.b16 %v1634
        %v1778 = vunpack.c.l.b16 %v1646
        %v1779 = vunpack.c.h.b16 %v1646
        %v1780 = vunpack.c.l.b16 %v1658
        %v1781 = vunpack.c.h.b16 %v1658
        %v1782 = vunpack.c.l.b16 %v1670
        %v1783 = vunpack.c.h.b16 %v1670
        %v1784 = vunpack.c.l.b16 %v1682
        %v1785 = vunpack.c.h.b16 %v1682
        %v1786 = vpack.c.b16 %v1770, %v1770
        %v1787 = vpack.c.b16 %v1771, %v1771
        %v1788 = vpack.c.b16 %v1772, %v1772
        %v1789 = vpack.c.b16 %v1773, %v1773
        %v1790 = vpack.c.b16 %v1774, %v1774
        %v1791 = vpack.c.b16 %v1775, %v1775
        %v1792 = vpack.c.b16 %v1776, %v1776
        %v1793 = vpack.c.b16 %v1777, %v1777
        %v1794 = vpack.c.b16 %v1778, %v1778
        %v1795 = vpack.c.b16 %v1779, %v1779
        %v1796 = vpack.c.b16 %v1780, %v1780
        %v1797 = vpack.c.b16 %v1781, %v1781
        %v1798 = vpack.c.b16 %v1782, %v1782
        %v1799 = vpack.c.b16 %v1783, %v1783
        %v1800 = vpack.c.b16 %v1784, %v1784
        %v1801 = vpack.c.b16 %v1785, %v1785
        %1818 = vst [vmem:[%s263] sm:$0xf] %v1786
        %1819 = vst [vmem:[%s263 + $0x4] sm:$0xf] %v1787
        %1820 = vst [vmem:[%s263 + $0x8] sm:$0xf] %v1788
        %1821 = vst [vmem:[%s263 + $0xc] sm:$0xf] %v1789
        %1822 = vst [vmem:[%s263 + $0x10] sm:$0xf] %v1790
        %1823 = vst [vmem:[%s263 + $0x14] sm:$0xf] %v1791
        %1824 = vst [vmem:[%s263 + $0x18] sm:$0xf] %v1792
        %1825 = vst [vmem:[%s263 + $0x1c] sm:$0xf] %v1793
        %1826 = vst [vmem:[%s263 + $0x20] sm:$0xf] %v1794
        %1827 = vst [vmem:[%s263 + $0x24] sm:$0xf] %v1795
        %1828 = vst [vmem:[%s263 + $0x28] sm:$0xf] %v1796
        %1829 = vst [vmem:[%s263 + $0x2c] sm:$0xf] %v1797
        %1830 = vst [vmem:[%s263 + $0x30] sm:$0xf] %v1798
        %1831 = vst [vmem:[%s263 + $0x34] sm:$0xf] %v1799
        %1832 = vst [vmem:[%s263 + $0x38] sm:$0xf] %v1800
        %1833 = vst [vmem:[%s263 + $0x3c] sm:$0xf] %v1801
        %v1842 = vunpack.c.l.b16 %v1602
        %v1843 = vunpack.c.h.b16 %v1602
        %v1844 = vunpack.c.l.b16 %v1614
        %v1845 = vunpack.c.h.b16 %v1614
        %v1846 = vunpack.c.l.b16 %v1626
        %v1847 = vunpack.c.h.b16 %v1626
        %v1848 = vunpack.c.l.b16 %v1638
        %v1849 = vunpack.c.h.b16 %v1638
        %v1850 = vunpack.c.l.b16 %v1650
        %v1851 = vunpack.c.h.b16 %v1650
        %v1852 = vunpack.c.l.b16 %v1662
        %v1853 = vunpack.c.h.b16 %v1662
        %v1854 = vunpack.c.l.b16 %v1674
        %v1855 = vunpack.c.h.b16 %v1674
        %v1856 = vunpack.c.l.b16 %v1686
        %v1857 = vunpack.c.h.b16 %v1686
        %v1858 = vpack.c.b16 %v1842, %v1842
        %v1859 = vpack.c.b16 %v1843, %v1843
        %v1860 = vpack.c.b16 %v1844, %v1844
        %v1861 = vpack.c.b16 %v1845, %v1845
        %v1862 = vpack.c.b16 %v1846, %v1846
        %v1863 = vpack.c.b16 %v1847, %v1847
        %v1864 = vpack.c.b16 %v1848, %v1848
        %v1865 = vpack.c.b16 %v1849, %v1849
        %v1866 = vpack.c.b16 %v1850, %v1850
        %v1867 = vpack.c.b16 %v1851, %v1851
        %v1868 = vpack.c.b16 %v1852, %v1852
        %v1869 = vpack.c.b16 %v1853, %v1853
        %v1870 = vpack.c.b16 %v1854, %v1854
        %v1871 = vpack.c.b16 %v1855, %v1855
        %v1872 = vpack.c.b16 %v1856, %v1856
        %v1873 = vpack.c.b16 %v1857, %v1857
        %1890 = vst [vmem:[%s270] sm:$0xf] %v1858
        %1891 = vst [vmem:[%s270 + $0x4] sm:$0xf] %v1859
        %1892 = vst [vmem:[%s270 + $0x8] sm:$0xf] %v1860
        %1893 = vst [vmem:[%s270 + $0xc] sm:$0xf] %v1861
        %1894 = vst [vmem:[%s270 + $0x10] sm:$0xf] %v1862
        %1895 = vst [vmem:[%s270 + $0x14] sm:$0xf] %v1863
        %1896 = vst [vmem:[%s270 + $0x18] sm:$0xf] %v1864
        %1897 = vst [vmem:[%s270 + $0x1c] sm:$0xf] %v1865
        %1898 = vst [vmem:[%s270 + $0x20] sm:$0xf] %v1866
        %1899 = vst [vmem:[%s270 + $0x24] sm:$0xf] %v1867
        %1900 = vst [vmem:[%s270 + $0x28] sm:$0xf] %v1868
        %1901 = vst [vmem:[%s270 + $0x2c] sm:$0xf] %v1869
        %1902 = vst [vmem:[%s270 + $0x30] sm:$0xf] %v1870
        %1903 = vst [vmem:[%s270 + $0x34] sm:$0xf] %v1871
        %1904 = vst [vmem:[%s270 + $0x38] sm:$0xf] %v1872
        %1905 = vst [vmem:[%s270 + $0x3c] sm:$0xf] %v1873
        %v1914 = vunpack.c.l.b16 %v1595
        %v1915 = vunpack.c.h.b16 %v1595
        %v1916 = vunpack.c.l.b16 %v1607
        %v1917 = vunpack.c.h.b16 %v1607
        %v1918 = vunpack.c.l.b16 %v1619
        %v1919 = vunpack.c.h.b16 %v1619
        %v1920 = vunpack.c.l.b16 %v1631
        %v1921 = vunpack.c.h.b16 %v1631
        %v1922 = vunpack.c.l.b16 %v1643
        %v1923 = vunpack.c.h.b16 %v1643
        %v1924 = vunpack.c.l.b16 %v1655
        %v1925 = vunpack.c.h.b16 %v1655
        %v1926 = vunpack.c.l.b16 %v1667
        %v1927 = vunpack.c.h.b16 %v1667
        %v1928 = vunpack.c.l.b16 %v1679
        %v1929 = vunpack.c.h.b16 %v1679
        %v1930 = vpack.c.b16 %v1914, %v1914
        %v1931 = vpack.c.b16 %v1915, %v1915
        %v1932 = vpack.c.b16 %v1916, %v1916
        %v1933 = vpack.c.b16 %v1917, %v1917
        %v1934 = vpack.c.b16 %v1918, %v1918
        %v1935 = vpack.c.b16 %v1919, %v1919
        %v1936 = vpack.c.b16 %v1920, %v1920
        %v1937 = vpack.c.b16 %v1921, %v1921
        %v1938 = vpack.c.b16 %v1922, %v1922
        %v1939 = vpack.c.b16 %v1923, %v1923
        %v1940 = vpack.c.b16 %v1924, %v1924
        %v1941 = vpack.c.b16 %v1925, %v1925
        %v1942 = vpack.c.b16 %v1926, %v1926
        %v1943 = vpack.c.b16 %v1927, %v1927
        %v1944 = vpack.c.b16 %v1928, %v1928
        %v1945 = vpack.c.b16 %v1929, %v1929
        %s1962 = scalar_lea.vmem %s256, 64 [#allocation7]
        %1963 = vst [vmem:[%s1962] sm:$0xf] %v1930
        %1964 = vst [vmem:[%s1962 + $0x4] sm:$0xf] %v1931
        %1965 = vst [vmem:[%s1962 + $0x8] sm:$0xf] %v1932
        %1966 = vst [vmem:[%s1962 + $0xc] sm:$0xf] %v1933
        %1967 = vst [vmem:[%s1962 + $0x10] sm:$0xf] %v1934
        %1968 = vst [vmem:[%s1962 + $0x14] sm:$0xf] %v1935
        %1969 = vst [vmem:[%s1962 + $0x18] sm:$0xf] %v1936
        %1970 = vst [vmem:[%s1962 + $0x1c] sm:$0xf] %v1937
        %1971 = vst [vmem:[%s1962 + $0x20] sm:$0xf] %v1938
        %1972 = vst [vmem:[%s1962 + $0x24] sm:$0xf] %v1939
        %1973 = vst [vmem:[%s1962 + $0x28] sm:$0xf] %v1940
        %1974 = vst [vmem:[%s1962 + $0x2c] sm:$0xf] %v1941
        %1975 = vst [vmem:[%s1962 + $0x30] sm:$0xf] %v1942
        %1976 = vst [vmem:[%s1962 + $0x34] sm:$0xf] %v1943
        %1977 = vst [vmem:[%s1962 + $0x38] sm:$0xf] %v1944
        %1978 = vst [vmem:[%s1962 + $0x3c] sm:$0xf] %v1945
        %v1987 = vunpack.c.l.b16 %v1599
        %v1988 = vunpack.c.h.b16 %v1599
        %v1989 = vunpack.c.l.b16 %v1611
        %v1990 = vunpack.c.h.b16 %v1611
        %v1991 = vunpack.c.l.b16 %v1623
        %v1992 = vunpack.c.h.b16 %v1623
        %v1993 = vunpack.c.l.b16 %v1635
        %v1994 = vunpack.c.h.b16 %v1635
        %v1995 = vunpack.c.l.b16 %v1647
        %v1996 = vunpack.c.h.b16 %v1647
        %v1997 = vunpack.c.l.b16 %v1659
        %v1998 = vunpack.c.h.b16 %v1659
        %v1999 = vunpack.c.l.b16 %v1671
        %v2000 = vunpack.c.h.b16 %v1671
        %v2001 = vunpack.c.l.b16 %v1683
        %v2002 = vunpack.c.h.b16 %v1683
        %v2003 = vpack.c.b16 %v1987, %v1987
        %v2004 = vpack.c.b16 %v1988, %v1988
        %v2005 = vpack.c.b16 %v1989, %v1989
        %v2006 = vpack.c.b16 %v1990, %v1990
        %v2007 = vpack.c.b16 %v1991, %v1991
        %v2008 = vpack.c.b16 %v1992, %v1992
        %v2009 = vpack.c.b16 %v1993, %v1993
        %v2010 = vpack.c.b16 %v1994, %v1994
        %v2011 = vpack.c.b16 %v1995, %v1995
        %v2012 = vpack.c.b16 %v1996, %v1996
        %v2013 = vpack.c.b16 %v1997, %v1997
        %v2014 = vpack.c.b16 %v1998, %v1998
        %v2015 = vpack.c.b16 %v1999, %v1999
        %v2016 = vpack.c.b16 %v2000, %v2000
        %v2017 = vpack.c.b16 %v2001, %v2001
        %v2018 = vpack.c.b16 %v2002, %v2002
        %s2035 = scalar_lea.vmem %s263, 64 [#allocation8]
        %2036 = vst [vmem:[%s2035] sm:$0xf] %v2003
        %2037 = vst [vmem:[%s2035 + $0x4] sm:$0xf] %v2004
        %2038 = vst [vmem:[%s2035 + $0x8] sm:$0xf] %v2005
        %2039 = vst [vmem:[%s2035 + $0xc] sm:$0xf] %v2006
        %2040 = vst [vmem:[%s2035 + $0x10] sm:$0xf] %v2007
        %2041 = vst [vmem:[%s2035 + $0x14] sm:$0xf] %v2008
        %2042 = vst [vmem:[%s2035 + $0x18] sm:$0xf] %v2009
        %2043 = vst [vmem:[%s2035 + $0x1c] sm:$0xf] %v2010
        %2044 = vst [vmem:[%s2035 + $0x20] sm:$0xf] %v2011
        %2045 = vst [vmem:[%s2035 + $0x24] sm:$0xf] %v2012
        %2046 = vst [vmem:[%s2035 + $0x28] sm:$0xf] %v2013
        %2047 = vst [vmem:[%s2035 + $0x2c] sm:$0xf] %v2014
        %2048 = vst [vmem:[%s2035 + $0x30] sm:$0xf] %v2015
        %2049 = vst [vmem:[%s2035 + $0x34] sm:$0xf] %v2016
        %2050 = vst [vmem:[%s2035 + $0x38] sm:$0xf] %v2017
        %2051 = vst [vmem:[%s2035 + $0x3c] sm:$0xf] %v2018
        %v2060 = vunpack.c.l.b16 %v1603
        %v2061 = vunpack.c.h.b16 %v1603
        %v2062 = vunpack.c.l.b16 %v1615
        %v2063 = vunpack.c.h.b16 %v1615
        %v2064 = vunpack.c.l.b16 %v1627
        %v2065 = vunpack.c.h.b16 %v1627
        %v2066 = vunpack.c.l.b16 %v1639
        %v2067 = vunpack.c.h.b16 %v1639
        %v2068 = vunpack.c.l.b16 %v1651
        %v2069 = vunpack.c.h.b16 %v1651
        %v2070 = vunpack.c.l.b16 %v1663
        %v2071 = vunpack.c.h.b16 %v1663
        %v2072 = vunpack.c.l.b16 %v1675
        %v2073 = vunpack.c.h.b16 %v1675
        %v2074 = vunpack.c.l.b16 %v1687
        %v2075 = vunpack.c.h.b16 %v1687
        %v2076 = vpack.c.b16 %v2060, %v2060
        %v2077 = vpack.c.b16 %v2061, %v2061
        %v2078 = vpack.c.b16 %v2062, %v2062
        %v2079 = vpack.c.b16 %v2063, %v2063
        %v2080 = vpack.c.b16 %v2064, %v2064
        %v2081 = vpack.c.b16 %v2065, %v2065
        %v2082 = vpack.c.b16 %v2066, %v2066
        %v2083 = vpack.c.b16 %v2067, %v2067
        %v2084 = vpack.c.b16 %v2068, %v2068
        %v2085 = vpack.c.b16 %v2069, %v2069
        %v2086 = vpack.c.b16 %v2070, %v2070
        %v2087 = vpack.c.b16 %v2071, %v2071
        %v2088 = vpack.c.b16 %v2072, %v2072
        %v2089 = vpack.c.b16 %v2073, %v2073
        %v2090 = vpack.c.b16 %v2074, %v2074
        %v2091 = vpack.c.b16 %v2075, %v2075
        %s2108 = scalar_lea.vmem %s270, 64 [#allocation10]
        %2109 = vst [vmem:[%s2108] sm:$0xf] %v2076
        %2110 = vst [vmem:[%s2108 + $0x4] sm:$0xf] %v2077
        %2111 = vst [vmem:[%s2108 + $0x8] sm:$0xf] %v2078
        %2112 = vst [vmem:[%s2108 + $0xc] sm:$0xf] %v2079
        %2113 = vst [vmem:[%s2108 + $0x10] sm:$0xf] %v2080
        %2114 = vst [vmem:[%s2108 + $0x14] sm:$0xf] %v2081
        %2115 = vst [vmem:[%s2108 + $0x18] sm:$0xf] %v2082
        %2116 = vst [vmem:[%s2108 + $0x1c] sm:$0xf] %v2083
        %2117 = vst [vmem:[%s2108 + $0x20] sm:$0xf] %v2084
        %2118 = vst [vmem:[%s2108 + $0x24] sm:$0xf] %v2085
        %2119 = vst [vmem:[%s2108 + $0x28] sm:$0xf] %v2086
        %2120 = vst [vmem:[%s2108 + $0x2c] sm:$0xf] %v2087
        %2121 = vst [vmem:[%s2108 + $0x30] sm:$0xf] %v2088
        %2122 = vst [vmem:[%s2108 + $0x34] sm:$0xf] %v2089
        %2123 = vst [vmem:[%s2108 + $0x38] sm:$0xf] %v2090
        %2124 = vst [vmem:[%s2108 + $0x3c] sm:$0xf] %v2091
        %v2133 = vunpack.c.l.b16 %v1596
        %v2134 = vunpack.c.h.b16 %v1596
        %v2135 = vunpack.c.l.b16 %v1608
        %v2136 = vunpack.c.h.b16 %v1608
        %v2137 = vunpack.c.l.b16 %v1620
        %v2138 = vunpack.c.h.b16 %v1620
        %v2139 = vunpack.c.l.b16 %v1632
        %v2140 = vunpack.c.h.b16 %v1632
        %v2141 = vunpack.c.l.b16 %v1644
        %v2142 = vunpack.c.h.b16 %v1644
        %v2143 = vunpack.c.l.b16 %v1656
        %v2144 = vunpack.c.h.b16 %v1656
        %v2145 = vunpack.c.l.b16 %v1668
        %v2146 = vunpack.c.h.b16 %v1668
        %v2147 = vunpack.c.l.b16 %v1680
        %v2148 = vunpack.c.h.b16 %v1680
        %v2149 = vpack.c.b16 %v2133, %v2133
        %v2150 = vpack.c.b16 %v2134, %v2134
        %v2151 = vpack.c.b16 %v2135, %v2135
        %v2152 = vpack.c.b16 %v2136, %v2136
        %v2153 = vpack.c.b16 %v2137, %v2137
        %v2154 = vpack.c.b16 %v2138, %v2138
        %v2155 = vpack.c.b16 %v2139, %v2139
        %v2156 = vpack.c.b16 %v2140, %v2140
        %v2157 = vpack.c.b16 %v2141, %v2141
        %v2158 = vpack.c.b16 %v2142, %v2142
        %v2159 = vpack.c.b16 %v2143, %v2143
        %v2160 = vpack.c.b16 %v2144, %v2144
        %v2161 = vpack.c.b16 %v2145, %v2145
        %v2162 = vpack.c.b16 %v2146, %v2146
        %v2163 = vpack.c.b16 %v2147, %v2147
        %v2164 = vpack.c.b16 %v2148, %v2148
        %s2181 = scalar_lea.vmem %s256, 128 [#allocation7]
        %2182 = vst [vmem:[%s2181] sm:$0xf] %v2149
        %2183 = vst [vmem:[%s2181 + $0x4] sm:$0xf] %v2150
        %2184 = vst [vmem:[%s2181 + $0x8] sm:$0xf] %v2151
        %2185 = vst [vmem:[%s2181 + $0xc] sm:$0xf] %v2152
        %2186 = vst [vmem:[%s2181 + $0x10] sm:$0xf] %v2153
        %2187 = vst [vmem:[%s2181 + $0x14] sm:$0xf] %v2154
        %2188 = vst [vmem:[%s2181 + $0x18] sm:$0xf] %v2155
        %2189 = vst [vmem:[%s2181 + $0x1c] sm:$0xf] %v2156
        %2190 = vst [vmem:[%s2181 + $0x20] sm:$0xf] %v2157
        %2191 = vst [vmem:[%s2181 + $0x24] sm:$0xf] %v2158
        %2192 = vst [vmem:[%s2181 + $0x28] sm:$0xf] %v2159
        %2193 = vst [vmem:[%s2181 + $0x2c] sm:$0xf] %v2160
        %2194 = vst [vmem:[%s2181 + $0x30] sm:$0xf] %v2161
        %2195 = vst [vmem:[%s2181 + $0x34] sm:$0xf] %v2162
        %2196 = vst [vmem:[%s2181 + $0x38] sm:$0xf] %v2163
        %2197 = vst [vmem:[%s2181 + $0x3c] sm:$0xf] %v2164
        %v2206 = vunpack.c.l.b16 %v1600
        %v2207 = vunpack.c.h.b16 %v1600
        %v2208 = vunpack.c.l.b16 %v1612
        %v2209 = vunpack.c.h.b16 %v1612
        %v2210 = vunpack.c.l.b16 %v1624
        %v2211 = vunpack.c.h.b16 %v1624
        %v2212 = vunpack.c.l.b16 %v1636
        %v2213 = vunpack.c.h.b16 %v1636
        %v2214 = vunpack.c.l.b16 %v1648
        %v2215 = vunpack.c.h.b16 %v1648
        %v2216 = vunpack.c.l.b16 %v1660
        %v2217 = vunpack.c.h.b16 %v1660
        %v2218 = vunpack.c.l.b16 %v1672
        %v2219 = vunpack.c.h.b16 %v1672
        %v2220 = vunpack.c.l.b16 %v1684
        %v2221 = vunpack.c.h.b16 %v1684
        %v2222 = vpack.c.b16 %v2206, %v2206
        %v2223 = vpack.c.b16 %v2207, %v2207
        %v2224 = vpack.c.b16 %v2208, %v2208
        %v2225 = vpack.c.b16 %v2209, %v2209
        %v2226 = vpack.c.b16 %v2210, %v2210
        %v2227 = vpack.c.b16 %v2211, %v2211
        %v2228 = vpack.c.b16 %v2212, %v2212
        %v2229 = vpack.c.b16 %v2213, %v2213
        %v2230 = vpack.c.b16 %v2214, %v2214
        %v2231 = vpack.c.b16 %v2215, %v2215
        %v2232 = vpack.c.b16 %v2216, %v2216
        %v2233 = vpack.c.b16 %v2217, %v2217
        %v2234 = vpack.c.b16 %v2218, %v2218
        %v2235 = vpack.c.b16 %v2219, %v2219
        %v2236 = vpack.c.b16 %v2220, %v2220
        %v2237 = vpack.c.b16 %v2221, %v2221
        %s2254 = scalar_lea.vmem %s263, 128 [#allocation8]
        %2255 = vst [vmem:[%s2254] sm:$0xf] %v2222
        %2256 = vst [vmem:[%s2254 + $0x4] sm:$0xf] %v2223
        %2257 = vst [vmem:[%s2254 + $0x8] sm:$0xf] %v2224
        %2258 = vst [vmem:[%s2254 + $0xc] sm:$0xf] %v2225
        %2259 = vst [vmem:[%s2254 + $0x10] sm:$0xf] %v2226
        %2260 = vst [vmem:[%s2254 + $0x14] sm:$0xf] %v2227
        %2261 = vst [vmem:[%s2254 + $0x18] sm:$0xf] %v2228
        %2262 = vst [vmem:[%s2254 + $0x1c] sm:$0xf] %v2229
        %2263 = vst [vmem:[%s2254 + $0x20] sm:$0xf] %v2230
        %2264 = vst [vmem:[%s2254 + $0x24] sm:$0xf] %v2231
        %2265 = vst [vmem:[%s2254 + $0x28] sm:$0xf] %v2232
        %2266 = vst [vmem:[%s2254 + $0x2c] sm:$0xf] %v2233
        %2267 = vst [vmem:[%s2254 + $0x30] sm:$0xf] %v2234
        %2268 = vst [vmem:[%s2254 + $0x34] sm:$0xf] %v2235
        %2269 = vst [vmem:[%s2254 + $0x38] sm:$0xf] %v2236
        %2270 = vst [vmem:[%s2254 + $0x3c] sm:$0xf] %v2237
        %v2279 = vunpack.c.l.b16 %v1604
        %v2280 = vunpack.c.h.b16 %v1604
        %v2281 = vunpack.c.l.b16 %v1616
        %v2282 = vunpack.c.h.b16 %v1616
        %v2283 = vunpack.c.l.b16 %v1628
        %v2284 = vunpack.c.h.b16 %v1628
        %v2285 = vunpack.c.l.b16 %v1640
        %v2286 = vunpack.c.h.b16 %v1640
        %v2287 = vunpack.c.l.b16 %v1652
        %v2288 = vunpack.c.h.b16 %v1652
        %v2289 = vunpack.c.l.b16 %v1664
        %v2290 = vunpack.c.h.b16 %v1664
        %v2291 = vunpack.c.l.b16 %v1676
        %v2292 = vunpack.c.h.b16 %v1676
        %v2293 = vunpack.c.l.b16 %v1688
        %v2294 = vunpack.c.h.b16 %v1688
        %v2295 = vpack.c.b16 %v2279, %v2279
        %v2296 = vpack.c.b16 %v2280, %v2280
        %v2297 = vpack.c.b16 %v2281, %v2281
        %v2298 = vpack.c.b16 %v2282, %v2282
        %v2299 = vpack.c.b16 %v2283, %v2283
        %v2300 = vpack.c.b16 %v2284, %v2284
        %v2301 = vpack.c.b16 %v2285, %v2285
        %v2302 = vpack.c.b16 %v2286, %v2286
        %v2303 = vpack.c.b16 %v2287, %v2287
        %v2304 = vpack.c.b16 %v2288, %v2288
        %v2305 = vpack.c.b16 %v2289, %v2289
        %v2306 = vpack.c.b16 %v2290, %v2290
        %v2307 = vpack.c.b16 %v2291, %v2291
        %v2308 = vpack.c.b16 %v2292, %v2292
        %v2309 = vpack.c.b16 %v2293, %v2293
        %v2310 = vpack.c.b16 %v2294, %v2294
        %s2327 = scalar_lea.vmem %s270, 128 [#allocation10]
        %2328 = vst [vmem:[%s2327] sm:$0xf] %v2295
        %2329 = vst [vmem:[%s2327 + $0x4] sm:$0xf] %v2296
        %2330 = vst [vmem:[%s2327 + $0x8] sm:$0xf] %v2297
        %2331 = vst [vmem:[%s2327 + $0xc] sm:$0xf] %v2298
        %2332 = vst [vmem:[%s2327 + $0x10] sm:$0xf] %v2299
        %2333 = vst [vmem:[%s2327 + $0x14] sm:$0xf] %v2300
        %2334 = vst [vmem:[%s2327 + $0x18] sm:$0xf] %v2301
        %2335 = vst [vmem:[%s2327 + $0x1c] sm:$0xf] %v2302
        %2336 = vst [vmem:[%s2327 + $0x20] sm:$0xf] %v2303
        %2337 = vst [vmem:[%s2327 + $0x24] sm:$0xf] %v2304
        %2338 = vst [vmem:[%s2327 + $0x28] sm:$0xf] %v2305
        %2339 = vst [vmem:[%s2327 + $0x2c] sm:$0xf] %v2306
        %2340 = vst [vmem:[%s2327 + $0x30] sm:$0xf] %v2307
        %2341 = vst [vmem:[%s2327 + $0x34] sm:$0xf] %v2308
        %2342 = vst [vmem:[%s2327 + $0x38] sm:$0xf] %v2309
        %2343 = vst [vmem:[%s2327 + $0x3c] sm:$0xf] %v2310
        %v2352 = vunpack.c.l.b16 %v1597
        %v2353 = vunpack.c.h.b16 %v1597
        %v2354 = vunpack.c.l.b16 %v1609
        %v2355 = vunpack.c.h.b16 %v1609
        %v2356 = vunpack.c.l.b16 %v1621
        %v2357 = vunpack.c.h.b16 %v1621
        %v2358 = vunpack.c.l.b16 %v1633
        %v2359 = vunpack.c.h.b16 %v1633
        %v2360 = vunpack.c.l.b16 %v1645
        %v2361 = vunpack.c.h.b16 %v1645
        %v2362 = vunpack.c.l.b16 %v1657
        %v2363 = vunpack.c.h.b16 %v1657
        %v2364 = vunpack.c.l.b16 %v1669
        %v2365 = vunpack.c.h.b16 %v1669
        %v2366 = vunpack.c.l.b16 %v1681
        %v2367 = vunpack.c.h.b16 %v1681
        %v2368 = vpack.c.b16 %v2352, %v2352
        %v2369 = vpack.c.b16 %v2353, %v2353
        %v2370 = vpack.c.b16 %v2354, %v2354
        %v2371 = vpack.c.b16 %v2355, %v2355
        %v2372 = vpack.c.b16 %v2356, %v2356
        %v2373 = vpack.c.b16 %v2357, %v2357
        %v2374 = vpack.c.b16 %v2358, %v2358
        %v2375 = vpack.c.b16 %v2359, %v2359
        %v2376 = vpack.c.b16 %v2360, %v2360
        %v2377 = vpack.c.b16 %v2361, %v2361
        %v2378 = vpack.c.b16 %v2362, %v2362
        %v2379 = vpack.c.b16 %v2363, %v2363
        %v2380 = vpack.c.b16 %v2364, %v2364
        %v2381 = vpack.c.b16 %v2365, %v2365
        %v2382 = vpack.c.b16 %v2366, %v2366
        %v2383 = vpack.c.b16 %v2367, %v2367
        %s2400 = scalar_lea.vmem %s256, 192 [#allocation7]
        %2401 = vst [vmem:[%s2400] sm:$0xf] %v2368
        %2402 = vst [vmem:[%s2400 + $0x4] sm:$0xf] %v2369
        %2403 = vst [vmem:[%s2400 + $0x8] sm:$0xf] %v2370
        %2404 = vst [vmem:[%s2400 + $0xc] sm:$0xf] %v2371
        %2405 = vst [vmem:[%s2400 + $0x10] sm:$0xf] %v2372
        %2406 = vst [vmem:[%s2400 + $0x14] sm:$0xf] %v2373
        %2407 = vst [vmem:[%s2400 + $0x18] sm:$0xf] %v2374
        %2408 = vst [vmem:[%s2400 + $0x1c] sm:$0xf] %v2375
        %2409 = vst [vmem:[%s2400 + $0x20] sm:$0xf] %v2376
        %2410 = vst [vmem:[%s2400 + $0x24] sm:$0xf] %v2377
        %2411 = vst [vmem:[%s2400 + $0x28] sm:$0xf] %v2378
        %2412 = vst [vmem:[%s2400 + $0x2c] sm:$0xf] %v2379
        %2413 = vst [vmem:[%s2400 + $0x30] sm:$0xf] %v2380
        %2414 = vst [vmem:[%s2400 + $0x34] sm:$0xf] %v2381
        %2415 = vst [vmem:[%s2400 + $0x38] sm:$0xf] %v2382
        %2416 = vst [vmem:[%s2400 + $0x3c] sm:$0xf] %v2383
        %v2425 = vunpack.c.l.b16 %v1601
        %v2426 = vunpack.c.h.b16 %v1601
        %v2427 = vunpack.c.l.b16 %v1613
        %v2428 = vunpack.c.h.b16 %v1613
        %v2429 = vunpack.c.l.b16 %v1625
        %v2430 = vunpack.c.h.b16 %v1625
        %v2431 = vunpack.c.l.b16 %v1637
        %v2432 = vunpack.c.h.b16 %v1637
        %v2433 = vunpack.c.l.b16 %v1649
        %v2434 = vunpack.c.h.b16 %v1649
        %v2435 = vunpack.c.l.b16 %v1661
        %v2436 = vunpack.c.h.b16 %v1661
        %v2437 = vunpack.c.l.b16 %v1673
        %v2438 = vunpack.c.h.b16 %v1673
        %v2439 = vunpack.c.l.b16 %v1685
        %v2440 = vunpack.c.h.b16 %v1685
        %v2441 = vpack.c.b16 %v2425, %v2425
        %v2442 = vpack.c.b16 %v2426, %v2426
        %v2443 = vpack.c.b16 %v2427, %v2427
        %v2444 = vpack.c.b16 %v2428, %v2428
        %v2445 = vpack.c.b16 %v2429, %v2429
        %v2446 = vpack.c.b16 %v2430, %v2430
        %v2447 = vpack.c.b16 %v2431, %v2431
        %v2448 = vpack.c.b16 %v2432, %v2432
        %v2449 = vpack.c.b16 %v2433, %v2433
        %v2450 = vpack.c.b16 %v2434, %v2434
        %v2451 = vpack.c.b16 %v2435, %v2435
        %v2452 = vpack.c.b16 %v2436, %v2436
        %v2453 = vpack.c.b16 %v2437, %v2437
        %v2454 = vpack.c.b16 %v2438, %v2438
        %v2455 = vpack.c.b16 %v2439, %v2439
        %v2456 = vpack.c.b16 %v2440, %v2440
        %s2473 = scalar_lea.vmem %s263, 192 [#allocation8]
        %2474 = vst [vmem:[%s2473] sm:$0xf] %v2441
        %2475 = vst [vmem:[%s2473 + $0x4] sm:$0xf] %v2442
        %2476 = vst [vmem:[%s2473 + $0x8] sm:$0xf] %v2443
        %2477 = vst [vmem:[%s2473 + $0xc] sm:$0xf] %v2444
        %2478 = vst [vmem:[%s2473 + $0x10] sm:$0xf] %v2445
        %2479 = vst [vmem:[%s2473 + $0x14] sm:$0xf] %v2446
        %2480 = vst [vmem:[%s2473 + $0x18] sm:$0xf] %v2447
        %2481 = vst [vmem:[%s2473 + $0x1c] sm:$0xf] %v2448
        %2482 = vst [vmem:[%s2473 + $0x20] sm:$0xf] %v2449
        %2483 = vst [vmem:[%s2473 + $0x24] sm:$0xf] %v2450
        %2484 = vst [vmem:[%s2473 + $0x28] sm:$0xf] %v2451
        %2485 = vst [vmem:[%s2473 + $0x2c] sm:$0xf] %v2452
        %2486 = vst [vmem:[%s2473 + $0x30] sm:$0xf] %v2453
        %2487 = vst [vmem:[%s2473 + $0x34] sm:$0xf] %v2454
        %2488 = vst [vmem:[%s2473 + $0x38] sm:$0xf] %v2455
        %2489 = vst [vmem:[%s2473 + $0x3c] sm:$0xf] %v2456
        %v2498 = vunpack.c.l.b16 %v1605
        %v2499 = vunpack.c.h.b16 %v1605
        %v2500 = vunpack.c.l.b16 %v1617
        %v2501 = vunpack.c.h.b16 %v1617
        %v2502 = vunpack.c.l.b16 %v1629
        %v2503 = vunpack.c.h.b16 %v1629
        %v2504 = vunpack.c.l.b16 %v1641
        %v2505 = vunpack.c.h.b16 %v1641
        %v2506 = vunpack.c.l.b16 %v1653
        %v2507 = vunpack.c.h.b16 %v1653
        %v2508 = vunpack.c.l.b16 %v1665
        %v2509 = vunpack.c.h.b16 %v1665
        %v2510 = vunpack.c.l.b16 %v1677
        %v2511 = vunpack.c.h.b16 %v1677
        %v2512 = vunpack.c.l.b16 %v1689
        %v2513 = vunpack.c.h.b16 %v1689
        %v2514 = vpack.c.b16 %v2498, %v2498
        %v2515 = vpack.c.b16 %v2499, %v2499
        %v2516 = vpack.c.b16 %v2500, %v2500
        %v2517 = vpack.c.b16 %v2501, %v2501
        %v2518 = vpack.c.b16 %v2502, %v2502
        %v2519 = vpack.c.b16 %v2503, %v2503
        %v2520 = vpack.c.b16 %v2504, %v2504
        %v2521 = vpack.c.b16 %v2505, %v2505
        %v2522 = vpack.c.b16 %v2506, %v2506
        %v2523 = vpack.c.b16 %v2507, %v2507
        %v2524 = vpack.c.b16 %v2508, %v2508
        %v2525 = vpack.c.b16 %v2509, %v2509
        %v2526 = vpack.c.b16 %v2510, %v2510
        %v2527 = vpack.c.b16 %v2511, %v2511
        %v2528 = vpack.c.b16 %v2512, %v2512
        %v2529 = vpack.c.b16 %v2513, %v2513
        %s2546 = scalar_lea.vmem %s270, 192 [#allocation10]
        %2547 = vst [vmem:[%s2546] sm:$0xf] %v2514
        %2548 = vst [vmem:[%s2546 + $0x4] sm:$0xf] %v2515
        %2549 = vst [vmem:[%s2546 + $0x8] sm:$0xf] %v2516
        %2550 = vst [vmem:[%s2546 + $0xc] sm:$0xf] %v2517
        %2551 = vst [vmem:[%s2546 + $0x10] sm:$0xf] %v2518
        %2552 = vst [vmem:[%s2546 + $0x14] sm:$0xf] %v2519
        %2553 = vst [vmem:[%s2546 + $0x18] sm:$0xf] %v2520
        %2554 = vst [vmem:[%s2546 + $0x1c] sm:$0xf] %v2521
        %2555 = vst [vmem:[%s2546 + $0x20] sm:$0xf] %v2522
        %2556 = vst [vmem:[%s2546 + $0x24] sm:$0xf] %v2523
        %2557 = vst [vmem:[%s2546 + $0x28] sm:$0xf] %v2524
        %2558 = vst [vmem:[%s2546 + $0x2c] sm:$0xf] %v2525
        %2559 = vst [vmem:[%s2546 + $0x30] sm:$0xf] %v2526
        %2560 = vst [vmem:[%s2546 + $0x34] sm:$0xf] %v2527
        %2561 = vst [vmem:[%s2546 + $0x38] sm:$0xf] %v2528
        %2562 = vst [vmem:[%s2546 + $0x3c] sm:$0xf] %v2529
        %s2563 = sand.u32 %s97, 1
        %s2564 = scalar_lea.sflag [#allocation4], %s2563
        %s2565 = sand.u32 %s97, 1
        %s2566 = smul.addr %s2565, 256
        %s2567 = scalar_lea.vmem [#allocation7], %s2566
        %s2568 = sand.u32 %s26, 1
        %s2569 = scalar_lea.sflag [#allocation9], %s2568
        %s2570 = sand.u32 %s125, 1
        %s2571 = smul.addr %s2570, 256
        %s2572 = scalar_lea.vmem [#allocation8], %s2571
        %s2573 = sand.u32 %s26, 1
        %s2574 = scalar_lea.sflag [#allocation9], %s2573
        %s2575 = sand.u32 %s153, 1
        %s2576 = smul.addr %s2575, 256
        %s2577 = scalar_lea.vmem [#allocation10], %s2576
        // Predicated region
        $region37: #{tpu_custom_call.1} parent=27 // pred_check
          %p2578 = pneg %p107
        $region38: #{tpu_custom_call.1} parent=27 // pred_check_branch
          %2580 = sbr.rel (%p2578) target = $region40
        $region39: #{tpu_custom_call.1} parent=27 // pred_region
          %s2581 = smul.u32 16, %s31
          %s2583 = ssub.s32 4096, 4096
          %2584 = vsyncadd %s2564, %s2583
          %s2585 = smul.addr %s30, 64
          %s2586 = sadd.s32 %s2581, %s2585
          %s2587 = smul.addr %s2586, 64
          %s2588 = scalar_lea.hbm %s2, %s2587
          %s2589 = sshll.u32 %s2567, 4
          %s2590 = int_to_ptr.vmem [resolvable:$true] %s2589
          %2595 = dma.vmem_to_hbm [thread:$0]  %s2590, 4096, %s2588, %s2564, 64, 64, 4
        $region40: #{tpu_custom_call.1} parent=27 // pred_fallthru
          _
        // Predicated region
        $region41: #{tpu_custom_call.1} parent=27 // pred_check
          %p2596 = pneg %p135
        $region42: #{tpu_custom_call.1} parent=27 // pred_check_branch
          %2598 = sbr.rel (%p2596) target = $region44
        $region43: #{tpu_custom_call.1} parent=27 // pred_region
          %s2599 = smul.u32 16, %s31
          %s2601 = ssub.s32 4096, 4096
          %2602 = vsyncadd %s2569, %s2601
          %s2603 = smul.addr %s30, 64
          %s2604 = sadd.s32 %s2599, %s2603
          %s2605 = smul.addr %s2604, 64
          %s2606 = scalar_lea.hbm %s3, %s2605
          %s2607 = sshll.u32 %s2572, 4
          %s2608 = int_to_ptr.vmem [resolvable:$true] %s2607
          %2613 = dma.vmem_to_hbm [thread:$0]  %s2608, 4096, %s2606, %s2569, 64, 64, 4
        $region44: #{tpu_custom_call.1} parent=27 // pred_fallthru
          _
        // Predicated region
        $region45: #{tpu_custom_call.1} parent=27 // pred_check
          %p2614 = pneg %p163
        $region46: #{tpu_custom_call.1} parent=27 // pred_check_branch
          %2616 = sbr.rel (%p2614) target = $region48
        $region47: #{tpu_custom_call.1} parent=27 // pred_region
          %s2617 = smul.u32 16, %s31
          %s2619 = ssub.s32 4096, 4096
          %2620 = vsyncadd %s2574, %s2619
          %s2621 = smul.addr %s30, 64
          %s2622 = sadd.s32 %s2617, %s2621
          %s2623 = smul.addr %s2622, 64
          %s2624 = scalar_lea.hbm %s4, %s2623
          %s2625 = sshll.u32 %s2577, 4
          %s2626 = int_to_ptr.vmem [resolvable:$true] %s2625
          %2631 = dma.vmem_to_hbm [thread:$0]  %s2626, 4096, %s2624, %s2574, 64, 64, 4
        $region48: #{tpu_custom_call.1} parent=27 // pred_fallthru
          _
      $region28: #{tpu_custom_call.1} parent=5 // pred_fallthru
        _
      %p2632 = scmp.le.s32.totalorder 2, %s21
      // Predicated region
      $region49: #{tpu_custom_call.1} parent=5 // pred_check
        %p2633 = pneg %p2632
      $region50: #{tpu_custom_call.1} parent=5 // pred_check_branch
        %2635 = sbr.rel (%p2633) target = $region52
      $region51: #{tpu_custom_call.1} parent=5 // pred_region
        %s2636 = ssub.s32 %s21, 2
        // Predicated region
        $region53: #{tpu_custom_call.1} parent=51 // pred_check
          %p2637 = pneg %p113
        $region54: #{tpu_custom_call.1} parent=51 // pred_check_branch
          %2639 = sbr.rel (%p2637) target = $region56
        $region55: #{tpu_custom_call.1} parent=51 // pred_region
          %s2640 = sand.u32 %s98, 1
          %s2641 = scalar_lea.sflag [#allocation4], %s2640
          %s2642 = sand.u32 %s98, 1
          %s2643 = smul.addr %s2642, 256
          %s2644 = scalar_lea.vmem [#allocation7], %s2643
          %2645 = dma.done %s2641, 4096
        $region56: #{tpu_custom_call.1} parent=51 // pred_fallthru
          _
        // Predicated region
        $region57: #{tpu_custom_call.1} parent=51 // pred_check
          %p2646 = pneg %p141
        $region58: #{tpu_custom_call.1} parent=51 // pred_check_branch
          %2648 = sbr.rel (%p2646) target = $region60
        $region59: #{tpu_custom_call.1} parent=51 // pred_region
          %s2649 = sand.u32 %s27, 1
          %s2650 = scalar_lea.sflag [#allocation9], %s2649
          %s2651 = sand.u32 %s126, 1
          %s2652 = smul.addr %s2651, 256
          %s2653 = scalar_lea.vmem [#allocation8], %s2652
          %2654 = dma.done %s2650, 4096
        $region60: #{tpu_custom_call.1} parent=51 // pred_fallthru
          _
        // Predicated region
        $region61: #{tpu_custom_call.1} parent=51 // pred_check
          %p2655 = pneg %p169
        $region62: #{tpu_custom_call.1} parent=51 // pred_check_branch
          %2657 = sbr.rel (%p2655) target = $region64
        $region63: #{tpu_custom_call.1} parent=51 // pred_region
          %s2658 = sand.u32 %s27, 1
          %s2659 = scalar_lea.sflag [#allocation9], %s2658
          %s2660 = sand.u32 %s154, 1
          %s2661 = smul.addr %s2660, 256
          %s2662 = scalar_lea.vmem [#allocation10], %s2661
          %2663 = dma.done %s2659, 4096
        $region64: #{tpu_custom_call.1} parent=51 // pred_fallthru
          _
      $region52: #{tpu_custom_call.1} parent=5 // pred_fallthru
        _
    $region6: #{tpu_custom_call.1} parent=1 // loop_footer
      %s25 = sadd.s32 1, %s21
    $region7: #{tpu_custom_call.1} parent=1 // loop_footer_branch
      %20 = sbr.rel target = $region3
    $region8: #{tpu_custom_call.1} parent=1 // loop_exit
      _
    %2664 = vsyncpa [#allocation3], 1
    %s2665 = scalar_lea.sflag [#allocation3], 1
    %2666 = vsyncpa %s2665, 1
    %2667 = vsyncpa [#allocation6], 1
    %2668 = vsyncpa [#allocation4], 1
    %s2669 = scalar_lea.sflag [#allocation4], 1
    %2670 = vsyncpa %s2669, 1
    %2671 = vsyncpa [#allocation9], 1
    %s2672 = scalar_lea.sflag [#allocation9], 1
    %2673 = vsyncpa %s2672, 1

</llo_original>
